<compile_context>
chip_gen: v5e
topology: v5e:2x2
jax: 0.10.0
libtpu: 0.0.40
codegen_flags: <defaults>
</compile_context>

<pallas_src>
import math
from functools import partial

import jax
import jax.numpy as jnp
from jax.experimental import pallas as pl
from jax.experimental.pallas import tpu as pltpu


# ----------------------------- helpers --------------------------------------

def _row_tile(m, target=256):
    """Largest multiple-of-8 divisor of m that is <= target (or m itself)."""
    if m <= target:
        return m
    for t in range(target, 7, -8):
        if m % t == 0:
            return t
    return m


# ----------------------------- Pallas kernels ------------------------------

def _rmsnorm_kernel(x_ref, w_ref, o_ref, *, eps):
    x = x_ref[...].astype(jnp.float32)
    ms = jnp.mean(x * x, axis=-1, keepdims=True)
    y = x * jax.lax.rsqrt(ms + eps)
    o_ref[...] = (y * w_ref[...]).astype(o_ref.dtype)


def _proj(x, wt_ref, at_ref, bt_ref, scale):
    # base = x @ W^T ;  lora = (x @ A^T) @ B^T ;  out = base + scale * lora
    base = jnp.dot(x, wt_ref[...], preferred_element_type=jnp.float32)
    ax = jnp.dot(x, at_ref[...], preferred_element_type=jnp.float32)
    lora = jnp.dot(ax, bt_ref[...], preferred_element_type=jnp.float32)
    return base + scale * lora


def _lora_linear_kernel(xb_ref, xl_ref, wt_ref, at_ref, bt_ref, o_ref, *, scale):
    # base branch input and LoRA branch input may differ (wo projection).
    base = jnp.dot(xb_ref[...], wt_ref[...], preferred_element_type=jnp.float32)
    ax = jnp.dot(xl_ref[...], at_ref[...], preferred_element_type=jnp.float32)
    lora = jnp.dot(ax, bt_ref[...], preferred_element_type=jnp.float32)
    o_ref[...] = (base + scale * lora).astype(o_ref.dtype)


def _qkv_lora_kernel(x_ref, wq_ref, wk_ref, wv_ref,
                     aq_ref, bq_ref, ak_ref, bk_ref, av_ref, bv_ref,
                     q_ref, k_ref, v_ref, *, scale):
    x = x_ref[...]
    q_ref[...] = _proj(x, wq_ref, aq_ref, bq_ref, scale).astype(q_ref.dtype)
    k_ref[...] = _proj(x, wk_ref, ak_ref, bk_ref, scale).astype(k_ref.dtype)
    v_ref[...] = _proj(x, wv_ref, av_ref, bv_ref, scale).astype(v_ref.dtype)


def _ffn_gate_kernel(x_ref, w1_ref, a1_ref, b1_ref, w3_ref, a3_ref, b3_ref,
                     o_ref, *, scale):
    x = x_ref[...]
    g = _proj(x, w1_ref, a1_ref, b1_ref, scale)     # w1 branch
    u = _proj(x, w3_ref, a3_ref, b3_ref, scale)     # w3 branch
    o_ref[...] = ((g * jax.nn.sigmoid(g)) * u).astype(o_ref.dtype)   # silu(g) * u


def _attn_kernel(q_ref, k_ref, v_ref, m_ref, o_ref, *, sm_scale):
    q = q_ref[0, 0]          # (S, hd)
    k = k_ref[0, 0]          # (T, hd)
    v = v_ref[0, 0]          # (T, hd)
    s = jax.lax.dot_general(q, k, (((1,), (1,)), ((), ())),
                            preferred_element_type=jnp.float32)
    s = s * sm_scale + m_ref[...]
    s = s - jnp.max(s, axis=-1, keepdims=True)
    p = jnp.exp(s)
    p = p * pl.reciprocal(jnp.sum(p, axis=-1, keepdims=True), approx=False)
    o_ref[0, 0] = jnp.dot(p, v, preferred_element_type=jnp.float32).astype(o_ref.dtype)


# ------------------------------- wrappers -----------------------------------

def rmsnorm(x, w, eps):
    B, S, D = x.shape
    M = B * S
    xf = x.reshape(M, D)
    tm = _row_tile(M)
    out = pl.pallas_call(
        partial(_rmsnorm_kernel, eps=eps),
        grid=(M // tm,),
        in_specs=[pl.BlockSpec((tm, D), lambda i: (i, 0)),
                  pl.BlockSpec((1, D), lambda i: (0, 0))],
        out_specs=pl.BlockSpec((tm, D), lambda i: (i, 0)),
        out_shape=jax.ShapeDtypeStruct((M, D), x.dtype),
        compiler_params=pltpu.CompilerParams(dimension_semantics=("parallel",)),
    )(xf, w.reshape(1, D))
    return out.reshape(B, S, D)


def lora_linear(x_base, w, a, b, scale, x_lora=None):
    """x_base: (M, Din_base), w: (Dout, Din_base), a: (rank, Din_lora),
       b: (Dout, rank).  LoRA branch input defaults to the base input."""
    if x_lora is None:
        x_lora = x_base
    M, Din = x_base.shape
    Dl = x_lora.shape[1]
    Dout, r = w.shape[0], a.shape[0]
    tm = _row_tile(M)
    full = lambda shape: pl.BlockSpec(shape, lambda i: (0, 0))
    return pl.pallas_call(
        partial(_lora_linear_kernel, scale=scale),
        grid=(M // tm,),
        in_specs=[pl.BlockSpec((tm, Din), lambda i: (i, 0)),
                  pl.BlockSpec((tm, Dl), lambda i: (i, 0)),
                  full((Din, Dout)), full((Dl, r)), full((r, Dout))],
        out_specs=pl.BlockSpec((tm, Dout), lambda i: (i, 0)),
        out_shape=jax.ShapeDtypeStruct((M, Dout), jnp.float32),
        compiler_params=pltpu.CompilerParams(dimension_semantics=("parallel",)),
    )(x_base, x_lora, w.T, a.T, b.T)


def qkv_lora(x, p, scale):
    """Fused Q/K/V projections with LoRA: one pass over x, three outputs."""
    M, D = x.shape
    dq, dk, dv = p["wq"].shape[0], p["wk"].shape[0], p["wv"].shape[0]
    r = p["lora_wq_a"].shape[0]
    tm = _row_tile(M)
    full = lambda shape: pl.BlockSpec(shape, lambda i: (0, 0))
    row = lambda n: pl.BlockSpec((tm, n), lambda i: (i, 0))
    return pl.pallas_call(
        partial(_qkv_lora_kernel, scale=scale),
        grid=(M // tm,),
        in_specs=[row(D),
                  full((D, dq)), full((D, dk)), full((D, dv)),
                  full((D, r)), full((r, dq)),
                  full((D, r)), full((r, dk)),
                  full((D, r)), full((r, dv))],
        out_specs=[row(dq), row(dk), row(dv)],
        out_shape=[jax.ShapeDtypeStruct((M, dq), jnp.float32),
                   jax.ShapeDtypeStruct((M, dk), jnp.float32),
                   jax.ShapeDtypeStruct((M, dv), jnp.float32)],
        compiler_params=pltpu.CompilerParams(dimension_semantics=("parallel",)),
    )(x, p["wq"].T, p["wk"].T, p["wv"].T,
      p["lora_wq_a"].T, p["lora_wq_b"].T,
      p["lora_wk_a"].T, p["lora_wk_b"].T,
      p["lora_wv_a"].T, p["lora_wv_b"].T)


def ffn_gate(x, p, scale):
    """Fused silu(w1(x)+lora1) * (w3(x)+lora3); one pass over x."""
    M, D = x.shape
    H = p["w1"].shape[0]
    r = p["lora_w1_a"].shape[0]
    tm = _row_tile(M)
    full = lambda shape: pl.BlockSpec(shape, lambda i: (0, 0))
    return pl.pallas_call(
        partial(_ffn_gate_kernel, scale=scale),
        grid=(M // tm,),
        in_specs=[pl.BlockSpec((tm, D), lambda i: (i, 0)),
                  full((D, H)), full((D, r)), full((r, H)),
                  full((D, H)), full((D, r)), full((r, H))],
        out_specs=pl.BlockSpec((tm, H), lambda i: (i, 0)),
        out_shape=jax.ShapeDtypeStruct((M, H), jnp.float32),
        compiler_params=pltpu.CompilerParams(dimension_semantics=("parallel",)),
    )(x, p["w1"].T, p["lora_w1_a"].T, p["lora_w1_b"].T,
      p["w3"].T, p["lora_w3_a"].T, p["lora_w3_b"].T)


def attention_core(q, k, v, mask, sm_scale):
    B, H, S, hd = q.shape
    T = k.shape[2]
    return pl.pallas_call(
        partial(_attn_kernel, sm_scale=sm_scale),
        grid=(B, H),
        in_specs=[
            pl.BlockSpec((1, 1, S, hd), lambda b, h: (b, h, 0, 0)),
            pl.BlockSpec((1, 1, T, hd), lambda b, h: (b, h, 0, 0)),
            pl.BlockSpec((1, 1, T, hd), lambda b, h: (b, h, 0, 0)),
            pl.BlockSpec((S, T), lambda b, h: (0, 0)),
        ],
        out_specs=pl.BlockSpec((1, 1, S, hd), lambda b, h: (b, h, 0, 0)),
        out_shape=jax.ShapeDtypeStruct((B, H, S, hd), jnp.float32),
        compiler_params=pltpu.CompilerParams(
            dimension_semantics=("parallel", "parallel")),
    )(q, k, v, mask)


# ----------------------------- model pieces ---------------------------------

def precompute_freqs(dim, end, theta):
    freqs = 1.0 / theta ** (jnp.arange(0, dim, 2)[: dim // 2].astype(jnp.float32) / dim)
    t = jnp.arange(end, dtype=jnp.float32)
    freqs = jnp.outer(t, freqs)
    return jnp.cos(freqs), jnp.sin(freqs)   # real/imag parts of freqs_cis


def apply_rotary_emb(xq, xk, cos, sin):
    # xq/xk: (B, S, H, hd); cos/sin: (S, hd//2); interleaved (even=real, odd=imag)
    def rot(x):
        xr = x[..., 0::2]
        xi = x[..., 1::2]
        c = cos[None, :, None, :]
        s = sin[None, :, None, :]
        outr = xr * c - xi * s
        outi = xr * s + xi * c
        return jnp.stack([outr, outi], axis=-1).reshape(x.shape)
    return rot(xq), rot(xk)


def repeat_kv(x, n_rep):
    if n_rep == 1:
        return x
    return jnp.repeat(x, n_rep, axis=2)


def attention_forward(p, x, start_pos, cos, sin, mask, cache_k, cache_v, cfg):
    B, S, D = x.shape
    n_heads, n_kv, hd = cfg["n_heads"], cfg["n_kv_heads"], cfg["head_dim"]
    sc = cfg["alpha"] / cfg["rank"]
    xf = x.reshape(B * S, D)

    xq, xk, xv = qkv_lora(xf, p, sc)

    xq = xq.reshape(B, S, n_heads, hd)
    xk = xk.reshape(B, S, n_kv, hd)
    xv = xv.reshape(B, S, n_kv, hd)
    xq, xk = apply_rotary_emb(xq, xk, cos, sin)

    cache_k = jax.lax.dynamic_update_slice(cache_k, xk, (0, start_pos, 0, 0))
    cache_v = jax.lax.dynamic_update_slice(cache_v, xv, (0, start_pos, 0, 0))
    keys = cache_k[:B, : start_pos + S]
    values = cache_v[:B, : start_pos + S]

    n_rep = n_heads // n_kv
    keys = repeat_kv(keys, n_rep)
    values = repeat_kv(values, n_rep)

    q = jnp.transpose(xq, (0, 2, 1, 3))
    k = jnp.transpose(keys, (0, 2, 1, 3))
    v = jnp.transpose(values, (0, 2, 1, 3))

    out = attention_core(q, k, v, mask, 1.0 / math.sqrt(hd))
    out = jnp.transpose(out, (0, 2, 1, 3)).reshape(B * S, n_heads * hd)

    # Per the reference module, the wo-LoRA branch takes x (not the attention
    # output) as its input.
    y = lora_linear(out, p["wo"], p["lora_wo_a"], p["lora_wo_b"], sc, x_lora=xf)
    return y.reshape(B, S, D), cache_k, cache_v


def feedforward_forward(p, x, cfg):
    B, S, D = x.shape
    sc = cfg["alpha"] / cfg["rank"]
    xf = x.reshape(B * S, D)
    h = ffn_gate(xf, p, sc)                              # silu(w1+lora) * (w3+lora)
    out = lora_linear(h, p["w2"], p["lora_w2_a"], p["lora_w2_b"], sc)
    return out.reshape(B, S, D)


def block_forward(p, x, start_pos, cos, sin, mask, cache_k, cache_v, cfg):
    hn = rmsnorm(x, p["attention_norm"], cfg["norm_eps"])
    attn_out, cache_k, cache_v = attention_forward(
        p["attention"], hn, start_pos, cos, sin, mask, cache_k, cache_v, cfg)
    h = x + attn_out
    fn = rmsnorm(h, p["ffn_norm"], cfg["norm_eps"])
    out = h + feedforward_forward(p["feed_forward"], fn, cfg)
    return out, cache_k, cache_v


def transformer_forward(params, tokens, start_pos, caches, cfg):
    B, S = tokens.shape
    h = params["tok_embeddings"][tokens]                         # (B, S, D)
    cos = params["freqs_cos"][start_pos:start_pos + S]
    sin = params["freqs_sin"][start_pos:start_pos + S]

    if S > 1:
        mask = jnp.full((S, S), float("-inf"), dtype=jnp.float32)
        mask = jnp.triu(mask, k=1)
        mask = jnp.concatenate(
            [jnp.zeros((S, start_pos), dtype=jnp.float32), mask], axis=1)
    else:
        mask = jnp.zeros((S, start_pos + S), dtype=jnp.float32)

    new_caches = []
    for lp, (ck, cv) in zip(params["layers"], caches):
        h, ck, cv = block_forward(lp, h, start_pos, cos, sin, mask, ck, cv, cfg)
        new_caches.append((ck, cv))

    h = rmsnorm(h, params["norm"], cfg["norm_eps"])
    hf = h.reshape(B * S, cfg["dim"])
    sc = cfg["alpha"] / cfg["rank"]
    out = lora_linear(hf, params["w_output"],
                      params["lora_output_a"], params["lora_output_b"], sc)
    return out.reshape(B, S, cfg["vocab_size"]).astype(jnp.float32), new_caches


# --------------------------- parameter init ----------------------------------

def init_params(key, cfg):
    dim, vocab = cfg["dim"], cfg["vocab_size"]
    n_heads, n_kv, hd = cfg["n_heads"], cfg["n_kv_heads"], cfg["head_dim"]
    rank, hidden = cfg["rank"], cfg["hidden_dim"]

    def nrm(k, shape, scale=0.05):
        return scale * jax.random.normal(k, shape, dtype=jnp.float32)

    keys = iter(jax.random.split(key, 64 + 16 * cfg["n_layers"]))
    params = {
        "tok_embeddings": nrm(next(keys), (vocab, dim), 1.0),
        "norm": jnp.ones((dim,), jnp.float32),
        "w_output": nrm(next(keys), (vocab, dim)),
        # LoRA output adapters (zero-initialized in the reference module)
        "lora_output_a": jnp.zeros((rank, dim), jnp.float32),
        "lora_output_b": jnp.zeros((vocab, rank), jnp.float32),
    }
    cos, sin = precompute_freqs(hd, cfg["max_seq_len"] * 2, cfg["rope_theta"])
    params["freqs_cos"], params["freqs_sin"] = cos, sin

    layers = []
    for _ in range(cfg["n_layers"]):
        attn = {
            "wq": nrm(next(keys), (n_heads * hd, dim)),
            "wk": nrm(next(keys), (n_kv * hd, dim)),
            "wv": nrm(next(keys), (n_kv * hd, dim)),
            "wo": nrm(next(keys), (dim, n_heads * hd)),
            "lora_wq_a": jnp.zeros((rank, dim), jnp.float32),
            "lora_wq_b": jnp.zeros((n_heads * hd, rank), jnp.float32),
            "lora_wk_a": jnp.zeros((rank, dim), jnp.float32),
            "lora_wk_b": jnp.zeros((n_kv * hd, rank), jnp.float32),
            "lora_wv_a": jnp.zeros((rank, dim), jnp.float32),
            "lora_wv_b": jnp.zeros((n_kv * hd, rank), jnp.float32),
            "lora_wo_a": jnp.zeros((rank, n_heads * hd), jnp.float32),
            "lora_wo_b": jnp.zeros((dim, rank), jnp.float32),
        }
        ffn = {
            "w1": nrm(next(keys), (hidden, dim)),
            "w2": nrm(next(keys), (dim, hidden)),
            "w3": nrm(next(keys), (hidden, dim)),
            "lora_w1_a": jnp.zeros((rank, dim), jnp.float32),
            "lora_w1_b": jnp.zeros((hidden, rank), jnp.float32),
            "lora_w2_a": jnp.zeros((rank, hidden), jnp.float32),
            "lora_w2_b": jnp.zeros((dim, rank), jnp.float32),
            "lora_w3_a": jnp.zeros((rank, dim), jnp.float32),
            "lora_w3_b": jnp.zeros((hidden, rank), jnp.float32),
        }
        layers.append({
            "attention": attn,
            "feed_forward": ffn,
            "attention_norm": jnp.ones((dim,), jnp.float32),
            "ffn_norm": jnp.ones((dim,), jnp.float32),
        })
    params["layers"] = layers
    return params


# --------------------------------- main --------------------------------------

if __name__ == "__main__":
    dim, n_heads, n_kv_heads, n_layers = 32, 4, 2, 2
    vocab_size, multiple_of = 64, 32
    max_batch_size, max_seq_len = 2, 16
    rank, alpha = 8, 16.0

    head_dim = dim // n_heads
    hidden = int(2 * (4 * dim) / 3)
    hidden = multiple_of * ((hidden + multiple_of - 1) // multiple_of)

    cfg = dict(dim=dim, n_heads=n_heads, n_kv_heads=n_kv_heads,
               head_dim=head_dim, hidden_dim=hidden, n_layers=n_layers,
               vocab_size=vocab_size, norm_eps=1e-5, rope_theta=500000.0,
               max_seq_len=max_seq_len, rank=rank, alpha=alpha)

    key = jax.random.PRNGKey(0)
    pkey, tkey = jax.random.split(key)
    params = init_params(pkey, cfg)

    B, S, start_pos = 2, 8, 0
    tokens = jax.random.randint(tkey, (B, S), 0, vocab_size, dtype=jnp.int32)

    caches = [
        (jnp.zeros((max_batch_size, max_seq_len, n_kv_heads, head_dim), jnp.float32),
         jnp.zeros((max_batch_size, max_seq_len, n_kv_heads, head_dim), jnp.float32))
        for _ in range(n_layers)
    ]

    # start_pos and cfg are closed over (static at trace time); arrays traced.
    fwd = jax.jit(lambda p, t, c: transformer_forward(p, t, start_pos, c, cfg))
    logits, new_caches = fwd(params, tokens, caches)
    logits = jax.block_until_ready(logits)
    assert logits.shape == (B, S, vocab_size) and logits.dtype == jnp.float32
    assert bool(jnp.all(jnp.isfinite(logits)))
    print("KERNEL_OK")
</pallas_src>

<mosaic_0001>
module attributes {stable_mosaic.version = 11 : i64} {
  func.func @_rmsnorm_kernel(%arg0: i32, %arg1: memref<16x32xf32, #tpu.memory_space<vmem>>, %arg2: memref<1x32xf32, #tpu.memory_space<vmem>>, %arg3: memref<16x32xf32, #tpu.memory_space<vmem>>) attributes {dimension_semantics = [#tpu.dimension_semantics<parallel>], iteration_bounds = array<i64: 1>, scalar_prefetch = 0 : i64, scratch_operands = 0 : i64, tpu.core_type = #tpu.core_type<tc>, window_params = [{transform_indices = @transform_0, window_bounds = array<i64: 16, 32>}, {pipeline_mode = #tpu.pipeline_mode<synchronous>, transform_indices = @transform_1, window_bounds = array<i64: 1, 32>}, {transform_indices = @transform_2, window_bounds = array<i64: 16, 32>}]} {
    %c0 = arith.constant 0 : index
    %c0_0 = arith.constant 0 : index
    %0 = vector.load %arg1[%c0, %c0_0] : memref<16x32xf32, #tpu.memory_space<vmem>>, vector<16x32xf32>
    %1 = arith.mulf %0, %0 : vector<16x32xf32>
    %cst = arith.constant dense<0.000000e+00> : vector<16xf32>
    %2 = vector.multi_reduction <add>, %1, %cst [1] : vector<16x32xf32> to vector<16xf32>
    %3 = vector.shape_cast %2 : vector<16xf32> to vector<16x1xf32>
    %cst_1 = arith.constant 3.200000e+01 : f32
    %4 = vector.broadcast %cst_1 : f32 to vector<16x1xf32>
    %5 = arith.divf %3, %4 : vector<16x1xf32>
    %cst_2 = arith.constant 9.99999974E-6 : f32
    %6 = vector.broadcast %cst_2 : f32 to vector<16x1xf32>
    %7 = arith.addf %5, %6 : vector<16x1xf32>
    %8 = math.rsqrt %7 : vector<16x1xf32>
    %9 = vector.broadcast %8 : vector<16x1xf32> to vector<16x32xf32>
    %10 = arith.mulf %0, %9 : vector<16x32xf32>
    %c0_3 = arith.constant 0 : index
    %c0_4 = arith.constant 0 : index
    %11 = vector.load %arg2[%c0_3, %c0_4] : memref<1x32xf32, #tpu.memory_space<vmem>>, vector<1x32xf32>
    %12 = vector.broadcast %11 : vector<1x32xf32> to vector<16x32xf32>
    %13 = arith.mulf %10, %12 : vector<16x32xf32>
    %c0_5 = arith.constant 0 : index
    %c0_6 = arith.constant 0 : index
    %14 = vector.load %arg3[%c0_5, %c0_6] : memref<16x32xf32, #tpu.memory_space<vmem>>, vector<16x32xf32>
    tpu.vector_store %arg3[%c0_5, %c0_6], %13 {strides = array<i32>} : memref<16x32xf32, #tpu.memory_space<vmem>>, vector<16x32xf32>,
    return
  }
  func.func @transform_0(%arg0: i32) -> (i32, i32) {
    %c0_i32 = arith.constant 0 : i32
    %c0_i32_0 = arith.constant 0 : i32
    return %arg0, %c0_i32 : i32, i32
  }
  func.func @transform_1(%arg0: i32) -> (i32, i32) {
    %c0_i32 = arith.constant 0 : i32
    %c0_i32_0 = arith.constant 0 : i32
    %c0_i32_1 = arith.constant 0 : i32
    return %c0_i32, %c0_i32_0 : i32, i32
  }
  func.func @transform_2(%arg0: i32) -> (i32, i32) {
    %c0_i32 = arith.constant 0 : i32
    %c0_i32_0 = arith.constant 0 : i32
    return %arg0, %c0_i32 : i32, i32
  }
}

module attributes {stable_mosaic.version = 11 : i64} {
  func.func @_qkv_lora_kernel(%arg0: i32, %arg1: memref<16x32xf32, #tpu.memory_space<vmem>>, %arg2: memref<32x32xf32, #tpu.memory_space<vmem>>, %arg3: memref<32x16xf32, #tpu.memory_space<vmem>>, %arg4: memref<32x16xf32, #tpu.memory_space<vmem>>, %arg5: memref<32x8xf32, #tpu.memory_space<vmem>>, %arg6: memref<8x32xf32, #tpu.memory_space<vmem>>, %arg7: memref<32x8xf32, #tpu.memory_space<vmem>>, %arg8: memref<8x16xf32, #tpu.memory_space<vmem>>, %arg9: memref<32x8xf32, #tpu.memory_space<vmem>>, %arg10: memref<8x16xf32, #tpu.memory_space<vmem>>, %arg11: memref<16x32xf32, #tpu.memory_space<vmem>>, %arg12: memref<16x16xf32, #tpu.memory_space<vmem>>, %arg13: memref<16x16xf32, #tpu.memory_space<vmem>>) attributes {dimension_semantics = [#tpu.dimension_semantics<parallel>], iteration_bounds = array<i64: 1>, scalar_prefetch = 0 : i64, scratch_operands = 0 : i64, tpu.core_type = #tpu.core_type<tc>, window_params = [{transform_indices = @transform_0, window_bounds = array<i64: 16, 32>}, {pipeline_mode = #tpu.pipeline_mode<synchronous>, transform_indices = @transform_1, window_bounds = array<i64: 32, 32>}, {pipeline_mode = #tpu.pipeline_mode<synchronous>, transform_indices = @transform_2, window_bounds = array<i64: 32, 16>}, {pipeline_mode = #tpu.pipeline_mode<synchronous>, transform_indices = @transform_3, window_bounds = array<i64: 32, 16>}, {pipeline_mode = #tpu.pipeline_mode<synchronous>, transform_indices = @transform_4, window_bounds = array<i64: 32, 8>}, {pipeline_mode = #tpu.pipeline_mode<synchronous>, transform_indices = @transform_5, window_bounds = array<i64: 8, 32>}, {pipeline_mode = #tpu.pipeline_mode<synchronous>, transform_indices = @transform_6, window_bounds = array<i64: 32, 8>}, {pipeline_mode = #tpu.pipeline_mode<synchronous>, transform_indices = @transform_7, window_bounds = array<i64: 8, 16>}, {pipeline_mode = #tpu.pipeline_mode<synchronous>, transform_indices = @transform_8, window_bounds = array<i64: 32, 8>}, {pipeline_mode = #tpu.pipeline_mode<synchronous>, transform_indices = @transform_9, window_bounds = array<i64: 8, 16>}, {transform_indices = @transform_10, window_bounds = array<i64: 16, 32>}, {transform_indices = @transform_11, window_bounds = array<i64: 16, 16>}, {transform_indices = @transform_12, window_bounds = array<i64: 16, 16>}]} {
    %c0 = arith.constant 0 : index
    %c0_0 = arith.constant 0 : index
    %0 = vector.load %arg1[%c0, %c0_0] : memref<16x32xf32, #tpu.memory_space<vmem>>, vector<16x32xf32>
    %c0_1 = arith.constant 0 : index
    %c0_2 = arith.constant 0 : index
    %1 = vector.load %arg2[%c0_1, %c0_2] : memref<32x32xf32, #tpu.memory_space<vmem>>, vector<32x32xf32>
    %cst = arith.constant dense<0.000000e+00> : vector<16x32xf32>
    %2 = tpu.matmul %0, %1, %cst {dimension_numbers = #tpu.dot_dimension_numbers<[1], [0], [0], [1], [0, 0, 1, 1], [], []>} : vector<16x32xf32>, vector<32x32xf32>, vector<16x32xf32> -> vector<16x32xf32>
    %c0_3 = arith.constant 0 : index
    %c0_4 = arith.constant 0 : index
    %3 = vector.load %arg5[%c0_3, %c0_4] : memref<32x8xf32, #tpu.memory_space<vmem>>, vector<32x8xf32>
    %cst_5 = arith.constant dense<0.000000e+00> : vector<16x8xf32>
    %4 = tpu.matmul %0, %3, %cst_5 {dimension_numbers = #tpu.dot_dimension_numbers<[1], [0], [0], [1], [0, 0, 1, 1], [], []>} : vector<16x32xf32>, vector<32x8xf32>, vector<16x8xf32> -> vector<16x8xf32>
    %c0_6 = arith.constant 0 : index
    %c0_7 = arith.constant 0 : index
    %5 = vector.load %arg6[%c0_6, %c0_7] : memref<8x32xf32, #tpu.memory_space<vmem>>, vector<8x32xf32>
    %cst_8 = arith.constant dense<0.000000e+00> : vector<16x32xf32>
    %6 = tpu.matmul %4, %5, %cst_8 {dimension_numbers = #tpu.dot_dimension_numbers<[1], [0], [0], [1], [0, 0, 1, 1], [], []>} : vector<16x8xf32>, vector<8x32xf32>, vector<16x32xf32> -> vector<16x32xf32>
    %cst_9 = arith.constant 2.000000e+00 : f32
    %7 = vector.broadcast %cst_9 : f32 to vector<16x32xf32>
    %8 = arith.mulf %7, %6 : vector<16x32xf32>
    %9 = arith.addf %2, %8 : vector<16x32xf32>
    %c0_10 = arith.constant 0 : index
    %c0_11 = arith.constant 0 : index
    %10 = vector.load %arg11[%c0_10, %c0_11] : memref<16x32xf32, #tpu.memory_space<vmem>>, vector<16x32xf32>
    tpu.vector_store %arg11[%c0_10, %c0_11], %9 {strides = array<i32>} : memref<16x32xf32, #tpu.memory_space<vmem>>, vector<16x32xf32>,
    %c0_12 = arith.constant 0 : index
    %c0_13 = arith.constant 0 : index
    %11 = vector.load %arg3[%c0_12, %c0_13] : memref<32x16xf32, #tpu.memory_space<vmem>>, vector<32x16xf32>
    %cst_14 = arith.constant dense<0.000000e+00> : vector<16x16xf32>
    %12 = tpu.matmul %0, %11, %cst_14 {dimension_numbers = #tpu.dot_dimension_numbers<[1], [0], [0], [1], [0, 0, 1, 1], [], []>} : vector<16x32xf32>, vector<32x16xf32>, vector<16x16xf32> -> vector<16x16xf32>
    %c0_15 = arith.constant 0 : index
    %c0_16 = arith.constant 0 : index
    %13 = vector.load %arg7[%c0_15, %c0_16] : memref<32x8xf32, #tpu.memory_space<vmem>>, vector<32x8xf32>
    %cst_17 = arith.constant dense<0.000000e+00> : vector<16x8xf32>
    %14 = tpu.matmul %0, %13, %cst_17 {dimension_numbers = #tpu.dot_dimension_numbers<[1], [0], [0], [1], [0, 0, 1, 1], [], []>} : vector<16x32xf32>, vector<32x8xf32>, vector<16x8xf32> -> vector<16x8xf32>
    %c0_18 = arith.constant 0 : index
    %c0_19 = arith.constant 0 : index
    %15 = vector.load %arg8[%c0_18, %c0_19] : memref<8x16xf32, #tpu.memory_space<vmem>>, vector<8x16xf32>
    %cst_20 = arith.constant dense<0.000000e+00> : vector<16x16xf32>
    %16 = tpu.matmul %14, %15, %cst_20 {dimension_numbers = #tpu.dot_dimension_numbers<[1], [0], [0], [1], [0, 0, 1, 1], [], []>} : vector<16x8xf32>, vector<8x16xf32>, vector<16x16xf32> -> vector<16x16xf32>
    %cst_21 = arith.constant 2.000000e+00 : f32
    %17 = vector.broadcast %cst_21 : f32 to vector<16x16xf32>
    %18 = arith.mulf %17, %16 : vector<16x16xf32>
    %19 = arith.addf %12, %18 : vector<16x16xf32>
    %c0_22 = arith.constant 0 : index
    %c0_23 = arith.constant 0 : index
    %20 = vector.load %arg12[%c0_22, %c0_23] : memref<16x16xf32, #tpu.memory_space<vmem>>, vector<16x16xf32>
    tpu.vector_store %arg12[%c0_22, %c0_23], %19 {strides = array<i32>} : memref<16x16xf32, #tpu.memory_space<vmem>>, vector<16x16xf32>,
    %c0_24 = arith.constant 0 : index
    %c0_25 = arith.constant 0 : index
    %21 = vector.load %arg4[%c0_24, %c0_25] : memref<32x16xf32, #tpu.memory_space<vmem>>, vector<32x16xf32>
    %cst_26 = arith.constant dense<0.000000e+00> : vector<16x16xf32>
    %22 = tpu.matmul %0, %21, %cst_26 {dimension_numbers = #tpu.dot_dimension_numbers<[1], [0], [0], [1], [0, 0, 1, 1], [], []>} : vector<16x32xf32>, vector<32x16xf32>, vector<16x16xf32> -> vector<16x16xf32>
    %c0_27 = arith.constant 0 : index
    %c0_28 = arith.constant 0 : index
    %23 = vector.load %arg9[%c0_27, %c0_28] : memref<32x8xf32, #tpu.memory_space<vmem>>, vector<32x8xf32>
    %cst_29 = arith.constant dense<0.000000e+00> : vector<16x8xf32>
    %24 = tpu.matmul %0, %23, %cst_29 {dimension_numbers = #tpu.dot_dimension_numbers<[1], [0], [0], [1], [0, 0, 1, 1], [], []>} : vector<16x32xf32>, vector<32x8xf32>, vector<16x8xf32> -> vector<16x8xf32>
    %c0_30 = arith.constant 0 : index
    %c0_31 = arith.constant 0 : index
    %25 = vector.load %arg10[%c0_30, %c0_31] : memref<8x16xf32, #tpu.memory_space<vmem>>, vector<8x16xf32>
    %cst_32 = arith.constant dense<0.000000e+00> : vector<16x16xf32>
    %26 = tpu.matmul %24, %25, %cst_32 {dimension_numbers = #tpu.dot_dimension_numbers<[1], [0], [0], [1], [0, 0, 1, 1], [], []>} : vector<16x8xf32>, vector<8x16xf32>, vector<16x16xf32> -> vector<16x16xf32>
    %cst_33 = arith.constant 2.000000e+00 : f32
    %27 = vector.broadcast %cst_33 : f32 to vector<16x16xf32>
    %28 = arith.mulf %27, %26 : vector<16x16xf32>
    %29 = arith.addf %22, %28 : vector<16x16xf32>
    %c0_34 = arith.constant 0 : index
    %c0_35 = arith.constant 0 : index
    %30 = vector.load %arg13[%c0_34, %c0_35] : memref<16x16xf32, #tpu.memory_space<vmem>>, vector<16x16xf32>
    tpu.vector_store %arg13[%c0_34, %c0_35], %29 {strides = array<i32>} : memref<16x16xf32, #tpu.memory_space<vmem>>, vector<16x16xf32>,
    return
  }
  func.func @transform_0(%arg0: i32) -> (i32, i32) {
    %c0_i32 = arith.constant 0 : i32
    %c0_i32_0 = arith.constant 0 : i32
    return %arg0, %c0_i32 : i32, i32
  }
  func.func @transform_1(%arg0: i32) -> (i32, i32) {
    %c0_i32 = arith.constant 0 : i32
    %c0_i32_0 = arith.constant 0 : i32
    %c0_i32_1 = arith.constant 0 : i32
    return %c0_i32, %c0_i32_0 : i32, i32
  }
  func.func @transform_2(%arg0: i32) -> (i32, i32) {
    %c0_i32 = arith.constant 0 : i32
    %c0_i32_0 = arith.constant 0 : i32
    %c0_i32_1 = arith.constant 0 : i32
    return %c0_i32, %c0_i32_0 : i32, i32
  }
  func.func @transform_3(%arg0: i32) -> (i32, i32) {
    %c0_i32 = arith.constant 0 : i32
    %c0_i32_0 = arith.constant 0 : i32
    %c0_i32_1 = arith.constant 0 : i32
    return %c0_i32, %c0_i32_0 : i32, i32
  }
  func.func @transform_4(%arg0: i32) -> (i32, i32) {
    %c0_i32 = arith.constant 0 : i32
    %c0_i32_0 = arith.constant 0 : i32
    %c0_i32_1 = arith.constant 0 : i32
    return %c0_i32, %c0_i32_0 : i32, i32
  }
  func.func @transform_5(%arg0: i32) -> (i32, i32) {
    %c0_i32 = arith.constant 0 : i32
    %c0_i32_0 = arith.constant 0 : i32
    %c0_i32_1 = arith.constant 0 : i32
    return %c0_i32, %c0_i32_0 : i32, i32
  }
  func.func @transform_6(%arg0: i32) -> (i32, i32) {
    %c0_i32 = arith.constant 0 : i32
    %c0_i32_0 = arith.constant 0 : i32
    %c0_i32_1 = arith.constant 0 : i32
    return %c0_i32, %c0_i32_0 : i32, i32
  }
  func.func @transform_7(%arg0: i32) -> (i32, i32) {
    %c0_i32 = arith.constant 0 : i32
    %c0_i32_0 = arith.constant 0 : i32
    %c0_i32_1 = arith.constant 0 : i32
    return %c0_i32, %c0_i32_0 : i32, i32
  }
  func.func @transform_8(%arg0: i32) -> (i32, i32) {
    %c0_i32 = arith.constant 0 : i32
    %c0_i32_0 = arith.constant 0 : i32
    %c0_i32_1 = arith.constant 0 : i32
    return %c0_i32, %c0_i32_0 : i32, i32
  }
  func.func @transform_9(%arg0: i32) -> (i32, i32) {
    %c0_i32 = arith.constant 0 : i32
    %c0_i32_0 = arith.constant 0 : i32
    %c0_i32_1 = arith.constant 0 : i32
    return %c0_i32, %c0_i32_0 : i32, i32
  }
  func.func @transform_10(%arg0: i32) -> (i32, i32) {
    %c0_i32 = arith.constant 0 : i32
    %c0_i32_0 = arith.constant 0 : i32
    return %arg0, %c0_i32 : i32, i32
  }
  func.func @transform_11(%arg0: i32) -> (i32, i32) {
    %c0_i32 = arith.constant 0 : i32
    %c0_i32_0 = arith.constant 0 : i32
    return %arg0, %c0_i32 : i32, i32
  }
  func.func @transform_12(%arg0: i32) -> (i32, i32) {
    %c0_i32 = arith.constant 0 : i32
    %c0_i32_0 = arith.constant 0 : i32
    return %arg0, %c0_i32 : i32, i32
  }
}

module attributes {stable_mosaic.version = 11 : i64} {
  func.func @_attn_kernel(%arg0: i32, %arg1: i32, %arg2: memref<1x1x8x8xf32, #tpu.memory_space<vmem>>, %arg3: memref<1x1x8x8xf32, #tpu.memory_space<vmem>>, %arg4: memref<1x1x8x8xf32, #tpu.memory_space<vmem>>, %arg5: memref<8x8xf32, #tpu.memory_space<vmem>>, %arg6: memref<1x1x8x8xf32, #tpu.memory_space<vmem>>) attributes {dimension_semantics = [#tpu.dimension_semantics<parallel>, #tpu.dimension_semantics<parallel>], iteration_bounds = array<i64: 2, 4>, scalar_prefetch = 0 : i64, scratch_operands = 0 : i64, tpu.core_type = #tpu.core_type<tc>, window_params = [{transform_indices = @transform_0, window_bounds = array<i64: 1, 1, 8, 8>}, {transform_indices = @transform_1, window_bounds = array<i64: 1, 1, 8, 8>}, {transform_indices = @transform_2, window_bounds = array<i64: 1, 1, 8, 8>}, {pipeline_mode = #tpu.pipeline_mode<synchronous>, transform_indices = @transform_3, window_bounds = array<i64: 8, 8>}, {transform_indices = @transform_4, window_bounds = array<i64: 1, 1, 8, 8>}]} {
    %c0 = arith.constant 0 : index
    %c0_0 = arith.constant 0 : index
    %c0_1 = arith.constant 0 : index
    %c0_2 = arith.constant 0 : index
    %0 = vector.load %arg2[%c0, %c0_0, %c0_1, %c0_2] : memref<1x1x8x8xf32, #tpu.memory_space<vmem>>, vector<1x1x8x8xf32>
    %1 = vector.shape_cast %0 : vector<1x1x8x8xf32> to vector<8x8xf32>
    %c0_3 = arith.constant 0 : index
    %c0_4 = arith.constant 0 : index
    %c0_5 = arith.constant 0 : index
    %c0_6 = arith.constant 0 : index
    %2 = vector.load %arg3[%c0_3, %c0_4, %c0_5, %c0_6] : memref<1x1x8x8xf32, #tpu.memory_space<vmem>>, vector<1x1x8x8xf32>
    %3 = vector.shape_cast %2 : vector<1x1x8x8xf32> to vector<8x8xf32>
    %c0_7 = arith.constant 0 : index
    %c0_8 = arith.constant 0 : index
    %c0_9 = arith.constant 0 : index
    %c0_10 = arith.constant 0 : index
    %4 = vector.load %arg4[%c0_7, %c0_8, %c0_9, %c0_10] : memref<1x1x8x8xf32, #tpu.memory_space<vmem>>, vector<1x1x8x8xf32>
    %5 = vector.shape_cast %4 : vector<1x1x8x8xf32> to vector<8x8xf32>
    %cst = arith.constant dense<0.000000e+00> : vector<8x8xf32>
    %6 = tpu.matmul %1, %3, %cst {dimension_numbers = #tpu.dot_dimension_numbers<[1], [1], [0], [0], [0, 0, 1, 0], [], []>} : vector<8x8xf32>, vector<8x8xf32>, vector<8x8xf32> -> vector<8x8xf32>
    %cst_11 = arith.constant 0.353553385 : f32
    %7 = vector.broadcast %cst_11 : f32 to vector<8x8xf32>
    %8 = arith.mulf %6, %7 : vector<8x8xf32>
    %c0_12 = arith.constant 0 : index
    %c0_13 = arith.constant 0 : index
    %9 = vector.load %arg5[%c0_12, %c0_13] : memref<8x8xf32, #tpu.memory_space<vmem>>, vector<8x8xf32>
    %10 = arith.addf %8, %9 : vector<8x8xf32>
    %cst_14 = arith.constant dense<0xFF800000> : vector<8xf32>
    %11 = vector.multi_reduction <maximumf>, %10, %cst_14 [1] : vector<8x8xf32> to vector<8xf32>
    %12 = vector.shape_cast %11 : vector<8xf32> to vector<8x1xf32>
    %13 = vector.broadcast %12 : vector<8x1xf32> to vector<8x8xf32>
    %14 = arith.subf %10, %13 : vector<8x8xf32>
    %15 = math.exp %14 : vector<8x8xf32>
    %cst_15 = arith.constant dense<0.000000e+00> : vector<8xf32>
    %16 = vector.multi_reduction <add>, %15, %cst_15 [1] : vector<8x8xf32> to vector<8xf32>
    %17 = vector.shape_cast %16 : vector<8xf32> to vector<8x1xf32>
    %18 = tpu.reciprocal %17 : vector<8x1xf32> -> vector<8x1xf32>
    %19 = vector.broadcast %18 : vector<8x1xf32> to vector<8x8xf32>
    %20 = arith.mulf %15, %19 : vector<8x8xf32>
    %cst_16 = arith.constant dense<0.000000e+00> : vector<8x8xf32>
    %21 = tpu.matmul %20, %5, %cst_16 {dimension_numbers = #tpu.dot_dimension_numbers<[1], [0], [0], [1], [0, 0, 1, 1], [], []>} : vector<8x8xf32>, vector<8x8xf32>, vector<8x8xf32> -> vector<8x8xf32>
    %c0_17 = arith.constant 0 : index
    %c0_18 = arith.constant 0 : index
    %c0_19 = arith.constant 0 : index
    %c0_20 = arith.constant 0 : index
    %22 = vector.load %arg6[%c0_17, %c0_18, %c0_19, %c0_20] : memref<1x1x8x8xf32, #tpu.memory_space<vmem>>, vector<1x1x8x8xf32>
    %23 = vector.shape_cast %22 : vector<1x1x8x8xf32> to vector<8x8xf32>
    %24 = vector.shape_cast %21 : vector<8x8xf32> to vector<1x1x8x8xf32>
    tpu.vector_store %arg6[%c0_17, %c0_18, %c0_19, %c0_20], %24 {strides = array<i32>} : memref<1x1x8x8xf32, #tpu.memory_space<vmem>>, vector<1x1x8x8xf32>,
    return
  }
  func.func @transform_0(%arg0: i32, %arg1: i32) -> (i32, i32, i32, i32) {
    %c0_i32 = arith.constant 0 : i32
    %c0_i32_0 = arith.constant 0 : i32
    %c0_i32_1 = arith.constant 0 : i32
    return %arg0, %arg1, %c0_i32, %c0_i32_0 : i32, i32, i32, i32
  }
  func.func @transform_1(%arg0: i32, %arg1: i32) -> (i32, i32, i32, i32) {
    %c0_i32 = arith.constant 0 : i32
    %c0_i32_0 = arith.constant 0 : i32
    %c0_i32_1 = arith.constant 0 : i32
    return %arg0, %arg1, %c0_i32, %c0_i32_0 : i32, i32, i32, i32
  }
  func.func @transform_2(%arg0: i32, %arg1: i32) -> (i32, i32, i32, i32) {
    %c0_i32 = arith.constant 0 : i32
    %c0_i32_0 = arith.constant 0 : i32
    %c0_i32_1 = arith.constant 0 : i32
    return %arg0, %arg1, %c0_i32, %c0_i32_0 : i32, i32, i32, i32
  }
  func.func @transform_3(%arg0: i32, %arg1: i32) -> (i32, i32) {
    %c0_i32 = arith.constant 0 : i32
    %c0_i32_0 = arith.constant 0 : i32
    %c0_i32_1 = arith.constant 0 : i32
    return %c0_i32, %c0_i32_0 : i32, i32
  }
  func.func @transform_4(%arg0: i32, %arg1: i32) -> (i32, i32, i32, i32) {
    %c0_i32 = arith.constant 0 : i32
    %c0_i32_0 = arith.constant 0 : i32
    %c0_i32_1 = arith.constant 0 : i32
    return %arg0, %arg1, %c0_i32, %c0_i32_0 : i32, i32, i32, i32
  }
}

module attributes {stable_mosaic.version = 11 : i64} {
  func.func @_lora_linear_kernel(%arg0: i32, %arg1: memref<16x32xf32, #tpu.memory_space<vmem>>, %arg2: memref<16x32xf32, #tpu.memory_space<vmem>>, %arg3: memref<32x32xf32, #tpu.memory_space<vmem>>, %arg4: memref<32x8xf32, #tpu.memory_space<vmem>>, %arg5: memref<8x32xf32, #tpu.memory_space<vmem>>, %arg6: memref<16x32xf32, #tpu.memory_space<vmem>>) attributes {dimension_semantics = [#tpu.dimension_semantics<parallel>], iteration_bounds = array<i64: 1>, scalar_prefetch = 0 : i64, scratch_operands = 0 : i64, tpu.core_type = #tpu.core_type<tc>, window_params = [{transform_indices = @transform_0, window_bounds = array<i64: 16, 32>}, {transform_indices = @transform_1, window_bounds = array<i64: 16, 32>}, {pipeline_mode = #tpu.pipeline_mode<synchronous>, transform_indices = @transform_2, window_bounds = array<i64: 32, 32>}, {pipeline_mode = #tpu.pipeline_mode<synchronous>, transform_indices = @transform_3, window_bounds = array<i64: 32, 8>}, {pipeline_mode = #tpu.pipeline_mode<synchronous>, transform_indices = @transform_4, window_bounds = array<i64: 8, 32>}, {transform_indices = @transform_5, window_bounds = array<i64: 16, 32>}]} {
    %c0 = arith.constant 0 : index
    %c0_0 = arith.constant 0 : index
    %0 = vector.load %arg1[%c0, %c0_0] : memref<16x32xf32, #tpu.memory_space<vmem>>, vector<16x32xf32>
    %c0_1 = arith.constant 0 : index
    %c0_2 = arith.constant 0 : index
    %1 = vector.load %arg3[%c0_1, %c0_2] : memref<32x32xf32, #tpu.memory_space<vmem>>, vector<32x32xf32>
    %cst = arith.constant dense<0.000000e+00> : vector<16x32xf32>
    %2 = tpu.matmul %0, %1, %cst {dimension_numbers = #tpu.dot_dimension_numbers<[1], [0], [0], [1], [0, 0, 1, 1], [], []>} : vector<16x32xf32>, vector<32x32xf32>, vector<16x32xf32> -> vector<16x32xf32>
    %c0_3 = arith.constant 0 : index
    %c0_4 = arith.constant 0 : index
    %3 = vector.load %arg2[%c0_3, %c0_4] : memref<16x32xf32, #tpu.memory_space<vmem>>, vector<16x32xf32>
    %c0_5 = arith.constant 0 : index
    %c0_6 = arith.constant 0 : index
    %4 = vector.load %arg4[%c0_5, %c0_6] : memref<32x8xf32, #tpu.memory_space<vmem>>, vector<32x8xf32>
    %cst_7 = arith.constant dense<0.000000e+00> : vector<16x8xf32>
    %5 = tpu.matmul %3, %4, %cst_7 {dimension_numbers = #tpu.dot_dimension_numbers<[1], [0], [0], [1], [0, 0, 1, 1], [], []>} : vector<16x32xf32>, vector<32x8xf32>, vector<16x8xf32> -> vector<16x8xf32>
    %c0_8 = arith.constant 0 : index
    %c0_9 = arith.constant 0 : index
    %6 = vector.load %arg5[%c0_8, %c0_9] : memref<8x32xf32, #tpu.memory_space<vmem>>, vector<8x32xf32>
    %cst_10 = arith.constant dense<0.000000e+00> : vector<16x32xf32>
    %7 = tpu.matmul %5, %6, %cst_10 {dimension_numbers = #tpu.dot_dimension_numbers<[1], [0], [0], [1], [0, 0, 1, 1], [], []>} : vector<16x8xf32>, vector<8x32xf32>, vector<16x32xf32> -> vector<16x32xf32>
    %cst_11 = arith.constant 2.000000e+00 : f32
    %8 = vector.broadcast %cst_11 : f32 to vector<16x32xf32>
    %9 = arith.mulf %8, %7 : vector<16x32xf32>
    %10 = arith.addf %2, %9 : vector<16x32xf32>
    %c0_12 = arith.constant 0 : index
    %c0_13 = arith.constant 0 : index
    %11 = vector.load %arg6[%c0_12, %c0_13] : memref<16x32xf32, #tpu.memory_space<vmem>>, vector<16x32xf32>
    tpu.vector_store %arg6[%c0_12, %c0_13], %10 {strides = array<i32>} : memref<16x32xf32, #tpu.memory_space<vmem>>, vector<16x32xf32>,
    return
  }
  func.func @transform_0(%arg0: i32) -> (i32, i32) {
    %c0_i32 = arith.constant 0 : i32
    %c0_i32_0 = arith.constant 0 : i32
    return %arg0, %c0_i32 : i32, i32
  }
  func.func @transform_1(%arg0: i32) -> (i32, i32) {
    %c0_i32 = arith.constant 0 : i32
    %c0_i32_0 = arith.constant 0 : i32
    return %arg0, %c0_i32 : i32, i32
  }
  func.func @transform_2(%arg0: i32) -> (i32, i32) {
    %c0_i32 = arith.constant 0 : i32
    %c0_i32_0 = arith.constant 0 : i32
    %c0_i32_1 = arith.constant 0 : i32
    return %c0_i32, %c0_i32_0 : i32, i32
  }
  func.func @transform_3(%arg0: i32) -> (i32, i32) {
    %c0_i32 = arith.constant 0 : i32
    %c0_i32_0 = arith.constant 0 : i32
    %c0_i32_1 = arith.constant 0 : i32
    return %c0_i32, %c0_i32_0 : i32, i32
  }
  func.func @transform_4(%arg0: i32) -> (i32, i32) {
    %c0_i32 = arith.constant 0 : i32
    %c0_i32_0 = arith.constant 0 : i32
    %c0_i32_1 = arith.constant 0 : i32
    return %c0_i32, %c0_i32_0 : i32, i32
  }
  func.func @transform_5(%arg0: i32) -> (i32, i32) {
    %c0_i32 = arith.constant 0 : i32
    %c0_i32_0 = arith.constant 0 : i32
    return %arg0, %c0_i32 : i32, i32
  }
}

module attributes {stable_mosaic.version = 11 : i64} {
  func.func @_ffn_gate_kernel(%arg0: i32, %arg1: memref<16x32xf32, #tpu.memory_space<vmem>>, %arg2: memref<32x96xf32, #tpu.memory_space<vmem>>, %arg3: memref<32x8xf32, #tpu.memory_space<vmem>>, %arg4: memref<8x96xf32, #tpu.memory_space<vmem>>, %arg5: memref<32x96xf32, #tpu.memory_space<vmem>>, %arg6: memref<32x8xf32, #tpu.memory_space<vmem>>, %arg7: memref<8x96xf32, #tpu.memory_space<vmem>>, %arg8: memref<16x96xf32, #tpu.memory_space<vmem>>) attributes {dimension_semantics = [#tpu.dimension_semantics<parallel>], iteration_bounds = array<i64: 1>, scalar_prefetch = 0 : i64, scratch_operands = 0 : i64, tpu.core_type = #tpu.core_type<tc>, window_params = [{transform_indices = @transform_0, window_bounds = array<i64: 16, 32>}, {pipeline_mode = #tpu.pipeline_mode<synchronous>, transform_indices = @transform_1, window_bounds = array<i64: 32, 96>}, {pipeline_mode = #tpu.pipeline_mode<synchronous>, transform_indices = @transform_2, window_bounds = array<i64: 32, 8>}, {pipeline_mode = #tpu.pipeline_mode<synchronous>, transform_indices = @transform_3, window_bounds = array<i64: 8, 96>}, {pipeline_mode = #tpu.pipeline_mode<synchronous>, transform_indices = @transform_4, window_bounds = array<i64: 32, 96>}, {pipeline_mode = #tpu.pipeline_mode<synchronous>, transform_indices = @transform_5, window_bounds = array<i64: 32, 8>}, {pipeline_mode = #tpu.pipeline_mode<synchronous>, transform_indices = @transform_6, window_bounds = array<i64: 8, 96>}, {transform_indices = @transform_7, window_bounds = array<i64: 16, 96>}]} {
    %c0 = arith.constant 0 : index
    %c0_0 = arith.constant 0 : index
    %0 = vector.load %arg1[%c0, %c0_0] : memref<16x32xf32, #tpu.memory_space<vmem>>, vector<16x32xf32>
    %c0_1 = arith.constant 0 : index
    %c0_2 = arith.constant 0 : index
    %1 = vector.load %arg2[%c0_1, %c0_2] : memref<32x96xf32, #tpu.memory_space<vmem>>, vector<32x96xf32>
    %cst = arith.constant dense<0.000000e+00> : vector<16x96xf32>
    %2 = tpu.matmul %0, %1, %cst {dimension_numbers = #tpu.dot_dimension_numbers<[1], [0], [0], [1], [0, 0, 1, 1], [], []>} : vector<16x32xf32>, vector<32x96xf32>, vector<16x96xf32> -> vector<16x96xf32>
    %c0_3 = arith.constant 0 : index
    %c0_4 = arith.constant 0 : index
    %3 = vector.load %arg3[%c0_3, %c0_4] : memref<32x8xf32, #tpu.memory_space<vmem>>, vector<32x8xf32>
    %cst_5 = arith.constant dense<0.000000e+00> : vector<16x8xf32>
    %4 = tpu.matmul %0, %3, %cst_5 {dimension_numbers = #tpu.dot_dimension_numbers<[1], [0], [0], [1], [0, 0, 1, 1], [], []>} : vector<16x32xf32>, vector<32x8xf32>, vector<16x8xf32> -> vector<16x8xf32>
    %c0_6 = arith.constant 0 : index
    %c0_7 = arith.constant 0 : index
    %5 = vector.load %arg4[%c0_6, %c0_7] : memref<8x96xf32, #tpu.memory_space<vmem>>, vector<8x96xf32>
    %cst_8 = arith.constant dense<0.000000e+00> : vector<16x96xf32>
    %6 = tpu.matmul %4, %5, %cst_8 {dimension_numbers = #tpu.dot_dimension_numbers<[1], [0], [0], [1], [0, 0, 1, 1], [], []>} : vector<16x8xf32>, vector<8x96xf32>, vector<16x96xf32> -> vector<16x96xf32>
    %cst_9 = arith.constant 2.000000e+00 : f32
    %7 = vector.broadcast %cst_9 : f32 to vector<16x96xf32>
    %8 = arith.mulf %7, %6 : vector<16x96xf32>
    %9 = arith.addf %2, %8 : vector<16x96xf32>
    %c0_10 = arith.constant 0 : index
    %c0_11 = arith.constant 0 : index
    %10 = vector.load %arg5[%c0_10, %c0_11] : memref<32x96xf32, #tpu.memory_space<vmem>>, vector<32x96xf32>
    %cst_12 = arith.constant dense<0.000000e+00> : vector<16x96xf32>
    %11 = tpu.matmul %0, %10, %cst_12 {dimension_numbers = #tpu.dot_dimension_numbers<[1], [0], [0], [1], [0, 0, 1, 1], [], []>} : vector<16x32xf32>, vector<32x96xf32>, vector<16x96xf32> -> vector<16x96xf32>
    %c0_13 = arith.constant 0 : index
    %c0_14 = arith.constant 0 : index
    %12 = vector.load %arg6[%c0_13, %c0_14] : memref<32x8xf32, #tpu.memory_space<vmem>>, vector<32x8xf32>
    %cst_15 = arith.constant dense<0.000000e+00> : vector<16x8xf32>
    %13 = tpu.matmul %0, %12, %cst_15 {dimension_numbers = #tpu.dot_dimension_numbers<[1], [0], [0], [1], [0, 0, 1, 1], [], []>} : vector<16x32xf32>, vector<32x8xf32>, vector<16x8xf32> -> vector<16x8xf32>
    %c0_16 = arith.constant 0 : index
    %c0_17 = arith.constant 0 : index
    %14 = vector.load %arg7[%c0_16, %c0_17] : memref<8x96xf32, #tpu.memory_space<vmem>>, vector<8x96xf32>
    %cst_18 = arith.constant dense<0.000000e+00> : vector<16x96xf32>
    %15 = tpu.matmul %13, %14, %cst_18 {dimension_numbers = #tpu.dot_dimension_numbers<[1], [0], [0], [1], [0, 0, 1, 1], [], []>} : vector<16x8xf32>, vector<8x96xf32>, vector<16x96xf32> -> vector<16x96xf32>
    %cst_19 = arith.constant 2.000000e+00 : f32
    %16 = vector.broadcast %cst_19 : f32 to vector<16x96xf32>
    %17 = arith.mulf %16, %15 : vector<16x96xf32>
    %18 = arith.addf %11, %17 : vector<16x96xf32>
    %19 = arith.negf %9 : vector<16x96xf32>
    %20 = math.exp %19 : vector<16x96xf32>
    %cst_20 = arith.constant 1.000000e+00 : f32
    %21 = vector.broadcast %cst_20 : f32 to vector<16x96xf32>
    %22 = arith.addf %21, %20 : vector<16x96xf32>
    %23 = arith.divf %21, %22 : vector<16x96xf32>
    %24 = arith.mulf %9, %23 : vector<16x96xf32>
    %25 = arith.mulf %24, %18 : vector<16x96xf32>
    %c0_21 = arith.constant 0 : index
    %c0_22 = arith.constant 0 : index
    %26 = vector.load %arg8[%c0_21, %c0_22] : memref<16x96xf32, #tpu.memory_space<vmem>>, vector<16x96xf32>
    tpu.vector_store %arg8[%c0_21, %c0_22], %25 {strides = array<i32>} : memref<16x96xf32, #tpu.memory_space<vmem>>, vector<16x96xf32>,
    return
  }
  func.func @transform_0(%arg0: i32) -> (i32, i32) {
    %c0_i32 = arith.constant 0 : i32
    %c0_i32_0 = arith.constant 0 : i32
    return %arg0, %c0_i32 : i32, i32
  }
  func.func @transform_1(%arg0: i32) -> (i32, i32) {
    %c0_i32 = arith.constant 0 : i32
    %c0_i32_0 = arith.constant 0 : i32
    %c0_i32_1 = arith.constant 0 : i32
    return %c0_i32, %c0_i32_0 : i32, i32
  }
  func.func @transform_2(%arg0: i32) -> (i32, i32) {
    %c0_i32 = arith.constant 0 : i32
    %c0_i32_0 = arith.constant 0 : i32
    %c0_i32_1 = arith.constant 0 : i32
    return %c0_i32, %c0_i32_0 : i32, i32
  }
  func.func @transform_3(%arg0: i32) -> (i32, i32) {
    %c0_i32 = arith.constant 0 : i32
    %c0_i32_0 = arith.constant 0 : i32
    %c0_i32_1 = arith.constant 0 : i32
    return %c0_i32, %c0_i32_0 : i32, i32
  }
  func.func @transform_4(%arg0: i32) -> (i32, i32) {
    %c0_i32 = arith.constant 0 : i32
    %c0_i32_0 = arith.constant 0 : i32
    %c0_i32_1 = arith.constant 0 : i32
    return %c0_i32, %c0_i32_0 : i32, i32
  }
  func.func @transform_5(%arg0: i32) -> (i32, i32) {
    %c0_i32 = arith.constant 0 : i32
    %c0_i32_0 = arith.constant 0 : i32
    %c0_i32_1 = arith.constant 0 : i32
    return %c0_i32, %c0_i32_0 : i32, i32
  }
  func.func @transform_6(%arg0: i32) -> (i32, i32) {
    %c0_i32 = arith.constant 0 : i32
    %c0_i32_0 = arith.constant 0 : i32
    %c0_i32_1 = arith.constant 0 : i32
    return %c0_i32, %c0_i32_0 : i32, i32
  }
  func.func @transform_7(%arg0: i32) -> (i32, i32) {
    %c0_i32 = arith.constant 0 : i32
    %c0_i32_0 = arith.constant 0 : i32
    return %arg0, %c0_i32 : i32, i32
  }
}

module attributes {stable_mosaic.version = 11 : i64} {
  func.func @_lora_linear_kernel(%arg0: i32, %arg1: memref<16x96xf32, #tpu.memory_space<vmem>>, %arg2: memref<16x96xf32, #tpu.memory_space<vmem>>, %arg3: memref<96x32xf32, #tpu.memory_space<vmem>>, %arg4: memref<96x8xf32, #tpu.memory_space<vmem>>, %arg5: memref<8x32xf32, #tpu.memory_space<vmem>>, %arg6: memref<16x32xf32, #tpu.memory_space<vmem>>) attributes {dimension_semantics = [#tpu.dimension_semantics<parallel>], iteration_bounds = array<i64: 1>, scalar_prefetch = 0 : i64, scratch_operands = 0 : i64, tpu.core_type = #tpu.core_type<tc>, window_params = [{transform_indices = @transform_0, window_bounds = array<i64: 16, 96>}, {transform_indices = @transform_1, window_bounds = array<i64: 16, 96>}, {pipeline_mode = #tpu.pipeline_mode<synchronous>, transform_indices = @transform_2, window_bounds = array<i64: 96, 32>}, {pipeline_mode = #tpu.pipeline_mode<synchronous>, transform_indices = @transform_3, window_bounds = array<i64: 96, 8>}, {pipeline_mode = #tpu.pipeline_mode<synchronous>, transform_indices = @transform_4, window_bounds = array<i64: 8, 32>}, {transform_indices = @transform_5, window_bounds = array<i64: 16, 32>}]} {
    %c0 = arith.constant 0 : index
    %c0_0 = arith.constant 0 : index
    %0 = vector.load %arg1[%c0, %c0_0] : memref<16x96xf32, #tpu.memory_space<vmem>>, vector<16x96xf32>
    %c0_1 = arith.constant 0 : index
    %c0_2 = arith.constant 0 : index
    %1 = vector.load %arg3[%c0_1, %c0_2] : memref<96x32xf32, #tpu.memory_space<vmem>>, vector<96x32xf32>
    %cst = arith.constant dense<0.000000e+00> : vector<16x32xf32>
    %2 = tpu.matmul %0, %1, %cst {dimension_numbers = #tpu.dot_dimension_numbers<[1], [0], [0], [1], [0, 0, 1, 1], [], []>} : vector<16x96xf32>, vector<96x32xf32>, vector<16x32xf32> -> vector<16x32xf32>
    %c0_3 = arith.constant 0 : index
    %c0_4 = arith.constant 0 : index
    %3 = vector.load %arg2[%c0_3, %c0_4] : memref<16x96xf32, #tpu.memory_space<vmem>>, vector<16x96xf32>
    %c0_5 = arith.constant 0 : index
    %c0_6 = arith.constant 0 : index
    %4 = vector.load %arg4[%c0_5, %c0_6] : memref<96x8xf32, #tpu.memory_space<vmem>>, vector<96x8xf32>
    %cst_7 = arith.constant dense<0.000000e+00> : vector<16x8xf32>
    %5 = tpu.matmul %3, %4, %cst_7 {dimension_numbers = #tpu.dot_dimension_numbers<[1], [0], [0], [1], [0, 0, 1, 1], [], []>} : vector<16x96xf32>, vector<96x8xf32>, vector<16x8xf32> -> vector<16x8xf32>
    %c0_8 = arith.constant 0 : index
    %c0_9 = arith.constant 0 : index
    %6 = vector.load %arg5[%c0_8, %c0_9] : memref<8x32xf32, #tpu.memory_space<vmem>>, vector<8x32xf32>
    %cst_10 = arith.constant dense<0.000000e+00> : vector<16x32xf32>
    %7 = tpu.matmul %5, %6, %cst_10 {dimension_numbers = #tpu.dot_dimension_numbers<[1], [0], [0], [1], [0, 0, 1, 1], [], []>} : vector<16x8xf32>, vector<8x32xf32>, vector<16x32xf32> -> vector<16x32xf32>
    %cst_11 = arith.constant 2.000000e+00 : f32
    %8 = vector.broadcast %cst_11 : f32 to vector<16x32xf32>
    %9 = arith.mulf %8, %7 : vector<16x32xf32>
    %10 = arith.addf %2, %9 : vector<16x32xf32>
    %c0_12 = arith.constant 0 : index
    %c0_13 = arith.constant 0 : index
    %11 = vector.load %arg6[%c0_12, %c0_13] : memref<16x32xf32, #tpu.memory_space<vmem>>, vector<16x32xf32>
    tpu.vector_store %arg6[%c0_12, %c0_13], %10 {strides = array<i32>} : memref<16x32xf32, #tpu.memory_space<vmem>>, vector<16x32xf32>,
    return
  }
  func.func @transform_0(%arg0: i32) -> (i32, i32) {
    %c0_i32 = arith.constant 0 : i32
    %c0_i32_0 = arith.constant 0 : i32
    return %arg0, %c0_i32 : i32, i32
  }
  func.func @transform_1(%arg0: i32) -> (i32, i32) {
    %c0_i32 = arith.constant 0 : i32
    %c0_i32_0 = arith.constant 0 : i32
    return %arg0, %c0_i32 : i32, i32
  }
  func.func @transform_2(%arg0: i32) -> (i32, i32) {
    %c0_i32 = arith.constant 0 : i32
    %c0_i32_0 = arith.constant 0 : i32
    %c0_i32_1 = arith.constant 0 : i32
    return %c0_i32, %c0_i32_0 : i32, i32
  }
  func.func @transform_3(%arg0: i32) -> (i32, i32) {
    %c0_i32 = arith.constant 0 : i32
    %c0_i32_0 = arith.constant 0 : i32
    %c0_i32_1 = arith.constant 0 : i32
    return %c0_i32, %c0_i32_0 : i32, i32
  }
  func.func @transform_4(%arg0: i32) -> (i32, i32) {
    %c0_i32 = arith.constant 0 : i32
    %c0_i32_0 = arith.constant 0 : i32
    %c0_i32_1 = arith.constant 0 : i32
    return %c0_i32, %c0_i32_0 : i32, i32
  }
  func.func @transform_5(%arg0: i32) -> (i32, i32) {
    %c0_i32 = arith.constant 0 : i32
    %c0_i32_0 = arith.constant 0 : i32
    return %arg0, %c0_i32 : i32, i32
  }
}

module attributes {stable_mosaic.version = 11 : i64} {
  func.func @_lora_linear_kernel(%arg0: i32, %arg1: memref<16x32xf32, #tpu.memory_space<vmem>>, %arg2: memref<16x32xf32, #tpu.memory_space<vmem>>, %arg3: memref<32x64xf32, #tpu.memory_space<vmem>>, %arg4: memref<32x8xf32, #tpu.memory_space<vmem>>, %arg5: memref<8x64xf32, #tpu.memory_space<vmem>>, %arg6: memref<16x64xf32, #tpu.memory_space<vmem>>) attributes {dimension_semantics = [#tpu.dimension_semantics<parallel>], iteration_bounds = array<i64: 1>, scalar_prefetch = 0 : i64, scratch_operands = 0 : i64, tpu.core_type = #tpu.core_type<tc>, window_params = [{transform_indices = @transform_0, window_bounds = array<i64: 16, 32>}, {transform_indices = @transform_1, window_bounds = array<i64: 16, 32>}, {pipeline_mode = #tpu.pipeline_mode<synchronous>, transform_indices = @transform_2, window_bounds = array<i64: 32, 64>}, {pipeline_mode = #tpu.pipeline_mode<synchronous>, transform_indices = @transform_3, window_bounds = array<i64: 32, 8>}, {pipeline_mode = #tpu.pipeline_mode<synchronous>, transform_indices = @transform_4, window_bounds = array<i64: 8, 64>}, {transform_indices = @transform_5, window_bounds = array<i64: 16, 64>}]} {
    %c0 = arith.constant 0 : index
    %c0_0 = arith.constant 0 : index
    %0 = vector.load %arg1[%c0, %c0_0] : memref<16x32xf32, #tpu.memory_space<vmem>>, vector<16x32xf32>
    %c0_1 = arith.constant 0 : index
    %c0_2 = arith.constant 0 : index
    %1 = vector.load %arg3[%c0_1, %c0_2] : memref<32x64xf32, #tpu.memory_space<vmem>>, vector<32x64xf32>
    %cst = arith.constant dense<0.000000e+00> : vector<16x64xf32>
    %2 = tpu.matmul %0, %1, %cst {dimension_numbers = #tpu.dot_dimension_numbers<[1], [0], [0], [1], [0, 0, 1, 1], [], []>} : vector<16x32xf32>, vector<32x64xf32>, vector<16x64xf32> -> vector<16x64xf32>
    %c0_3 = arith.constant 0 : index
    %c0_4 = arith.constant 0 : index
    %3 = vector.load %arg2[%c0_3, %c0_4] : memref<16x32xf32, #tpu.memory_space<vmem>>, vector<16x32xf32>
    %c0_5 = arith.constant 0 : index
    %c0_6 = arith.constant 0 : index
    %4 = vector.load %arg4[%c0_5, %c0_6] : memref<32x8xf32, #tpu.memory_space<vmem>>, vector<32x8xf32>
    %cst_7 = arith.constant dense<0.000000e+00> : vector<16x8xf32>
    %5 = tpu.matmul %3, %4, %cst_7 {dimension_numbers = #tpu.dot_dimension_numbers<[1], [0], [0], [1], [0, 0, 1, 1], [], []>} : vector<16x32xf32>, vector<32x8xf32>, vector<16x8xf32> -> vector<16x8xf32>
    %c0_8 = arith.constant 0 : index
    %c0_9 = arith.constant 0 : index
    %6 = vector.load %arg5[%c0_8, %c0_9] : memref<8x64xf32, #tpu.memory_space<vmem>>, vector<8x64xf32>
    %cst_10 = arith.constant dense<0.000000e+00> : vector<16x64xf32>
    %7 = tpu.matmul %5, %6, %cst_10 {dimension_numbers = #tpu.dot_dimension_numbers<[1], [0], [0], [1], [0, 0, 1, 1], [], []>} : vector<16x8xf32>, vector<8x64xf32>, vector<16x64xf32> -> vector<16x64xf32>
    %cst_11 = arith.constant 2.000000e+00 : f32
    %8 = vector.broadcast %cst_11 : f32 to vector<16x64xf32>
    %9 = arith.mulf %8, %7 : vector<16x64xf32>
    %10 = arith.addf %2, %9 : vector<16x64xf32>
    %c0_12 = arith.constant 0 : index
    %c0_13 = arith.constant 0 : index
    %11 = vector.load %arg6[%c0_12, %c0_13] : memref<16x64xf32, #tpu.memory_space<vmem>>, vector<16x64xf32>
    tpu.vector_store %arg6[%c0_12, %c0_13], %10 {strides = array<i32>} : memref<16x64xf32, #tpu.memory_space<vmem>>, vector<16x64xf32>,
    return
  }
  func.func @transform_0(%arg0: i32) -> (i32, i32) {
    %c0_i32 = arith.constant 0 : i32
    %c0_i32_0 = arith.constant 0 : i32
    return %arg0, %c0_i32 : i32, i32
  }
  func.func @transform_1(%arg0: i32) -> (i32, i32) {
    %c0_i32 = arith.constant 0 : i32
    %c0_i32_0 = arith.constant 0 : i32
    return %arg0, %c0_i32 : i32, i32
  }
  func.func @transform_2(%arg0: i32) -> (i32, i32) {
    %c0_i32 = arith.constant 0 : i32
    %c0_i32_0 = arith.constant 0 : i32
    %c0_i32_1 = arith.constant 0 : i32
    return %c0_i32, %c0_i32_0 : i32, i32
  }
  func.func @transform_3(%arg0: i32) -> (i32, i32) {
    %c0_i32 = arith.constant 0 : i32
    %c0_i32_0 = arith.constant 0 : i32
    %c0_i32_1 = arith.constant 0 : i32
    return %c0_i32, %c0_i32_0 : i32, i32
  }
  func.func @transform_4(%arg0: i32) -> (i32, i32) {
    %c0_i32 = arith.constant 0 : i32
    %c0_i32_0 = arith.constant 0 : i32
    %c0_i32_1 = arith.constant 0 : i32
    return %c0_i32, %c0_i32_0 : i32, i32
  }
  func.func @transform_5(%arg0: i32) -> (i32, i32) {
    %c0_i32 = arith.constant 0 : i32
    %c0_i32_0 = arith.constant 0 : i32
    return %arg0, %c0_i32 : i32, i32
  }
}

</mosaic_0001>

<llo_original>
// kernel: _lambda_.16
$region0: #{_lambda_.16}
  #allocation0 [shape = 'u32[]', space=smem, size = 0x4, offset = 0x4, fixed_abs, tag = 'smem constant byte address 0x4 - core index']
  #allocation1 [shape = 'u32[72,128]{1,0:T(1,128)}', space=vmem, size = 0x9000, scoped, tag = 'internal scratch']
  %s0 = inlined_call_operand.vmem [shape: f32[16,32], index: 0, kind: input, shape index: {}]
  %s1 = inlined_call_operand.vmem [shape: f32[1,32], index: 1, kind: input, shape index: {}]
  %s2 = inlined_call_operand.vmem [shape: f32[16,32], index: 2, kind: output, shape index: {}]
  %s3 = sld [smem:[#allocation0]]
  $region18: #{_lambda_.16} parent=0
    _
  %s5 = ssub.s32 1, %s3
  %s6 = scalar_select 0, %s5, %s3
  // Predicated region
  $region2: #{_lambda_.16} parent=0 // pred_check
    _
  $region3: #{_lambda_.16} parent=0 // pred_check_branch
    %8 = sbr.rel (0) target = $region5
  $region4: #{_lambda_.16} parent=0 // pred_region
    _
  $region5: #{_lambda_.16} parent=0 // pred_fallthru
    _
  // Predicated region
  $region6: #{_lambda_.16} parent=0 // pred_check
    _
  $region7: #{_lambda_.16} parent=0 // pred_check_branch
    %10 = sbr.rel (0) target = $region9
  $region8: #{_lambda_.16} parent=0 // pred_region
    _
  $region9: #{_lambda_.16} parent=0 // pred_fallthru
    _
  %v11 = vld [vmem:[%s0] sm:$0xff]
  %v12 = vld [vmem:[%s0 + $0x8] sm:$0xff]
  %v13 = vmul.f32 %v11, %v11
  %v14 = vmul.f32 %v12, %v12
  %vm15 = vcmask 261120
  %v16 = vsel %vm15, %v13, 0.0
  %17 = vadd.xlane.f32.xlu0 %v16
  %v18 = vpop.xlane.xlu0 %17
  %v19 = vsel %vm15, %v14, 0.0
  %20 = vadd.xlane.f32.xlu0 %v19
  %v21 = vpop.xlane.xlu0 %20
  %v22 = vrcp.pop 32.0
  %v23 = vmul.f32 32.0, %v22
  %v24 = vsub.f32 1.0, %v23
  %v25 = vmul.f32 %v22, %v24
  %v26 = vadd.f32 %v22, %v25
  %vm27 = vweird.f32 %v22
  %v28 = vsel %vm27, %v22, %v26
  %v29 = vmul.f32 %v18, %v28
  %v30 = vmul.f32 %v21, %v28
  %v31 = vadd.f32 %v29, 1e-05
  %v32 = vadd.f32 %v30, 1e-05
  %v33 = vrsqrt.pop %v31
  %v34 = vmul.f32 %v33, %v31
  %v35 = vmul.f32 %v34, %v33
  %v36 = vmul.f32 0.5, %v35
  %v37 = vsub.f32 1.5, %v36
  %v38 = vmul.f32 %v33, %v37
  %vm39 = vweird.f32 %v31
  %vm40 = vweird.f32 %v33
  %vm41 = vmor %vm39, %vm40
  %v42 = vsel %vm41, %v33, %v38
  %v43 = vrsqrt.pop %v32
  %v44 = vmul.f32 %v43, %v32
  %v45 = vmul.f32 %v44, %v43
  %v46 = vmul.f32 0.5, %v45
  %v47 = vsub.f32 1.5, %v46
  %v48 = vmul.f32 %v43, %v47
  %vm49 = vweird.f32 %v32
  %vm50 = vweird.f32 %v43
  %vm51 = vmor %vm49, %vm50
  %v52 = vsel %vm51, %v43, %v48
  %v53 = vmul.f32 %v11, %v42
  %v54 = vmul.f32 %v12, %v52
  %v55 = vld [vmem:[%s1] sm:$0x1]
  %v57 = vperm.slane %v55, 0
  %v59 = vmul.f32 %v53, %v57
  %v60 = vmul.f32 %v54, %v57
  %61 = vst.msk [vmem:[%s2] sm:$0xff] %vm15, %v59
  %62 = vst.msk [vmem:[%s2 + $0x8] sm:$0xff] %vm15, %v60
  // Predicated region
  $region10: #{_lambda_.16} parent=0 // pred_check
    _
  $region11: #{_lambda_.16} parent=0 // pred_check_branch
    %64 = sbr.rel (0) target = $region13
  $region12: #{_lambda_.16} parent=0 // pred_region
    _
  $region13: #{_lambda_.16} parent=0 // pred_fallthru
    _
  // Predicated region
  $region14: #{_lambda_.16} parent=0 // pred_check
    _
  $region15: #{_lambda_.16} parent=0 // pred_check_branch
    %66 = sbr.rel (0) target = $region17
  $region16: #{_lambda_.16} parent=0 // pred_region
    _
  $region17: #{_lambda_.16} parent=0 // pred_fallthru
    _

// kernel: _lambda_.17
$region0: #{_lambda_.17}
  #allocation0 [shape = 'u32[]', space=smem, size = 0x4, offset = 0x4, fixed_abs, tag = 'smem constant byte address 0x4 - core index']
  #allocation1 [shape = 'u32[72,128]{1,0:T(1,128)}', space=vmem, size = 0x9000, scoped, tag = 'internal scratch']
  %s0 = inlined_call_operand.vmem [shape: f32[16,32], index: 0, kind: input, shape index: {}]
  %s1 = inlined_call_operand.vmem [shape: f32[32,32], index: 1, kind: input, shape index: {}]
  %s2 = inlined_call_operand.vmem [shape: f32[32,16], index: 2, kind: input, shape index: {}]
  %s3 = inlined_call_operand.vmem [shape: f32[32,16], index: 3, kind: input, shape index: {}]
  %s4 = inlined_call_operand.vmem [shape: f32[32,8], index: 4, kind: input, shape index: {}]
  %s5 = inlined_call_operand.vmem [shape: f32[8,32], index: 5, kind: input, shape index: {}]
  %s6 = inlined_call_operand.vmem [shape: f32[32,8], index: 6, kind: input, shape index: {}]
  %s7 = inlined_call_operand.vmem [shape: f32[8,16], index: 7, kind: input, shape index: {}]
  %s8 = inlined_call_operand.vmem [shape: f32[32,8], index: 8, kind: input, shape index: {}]
  %s9 = inlined_call_operand.vmem [shape: f32[8,16], index: 9, kind: input, shape index: {}]
  %s10 = inlined_call_operand.vmem [shape: f32[16,32], index: 10, kind: output, shape index: {0}]
  %s11 = inlined_call_operand.vmem [shape: f32[16,16], index: 11, kind: output, shape index: {1}]
  %s12 = inlined_call_operand.vmem [shape: f32[16,16], index: 12, kind: output, shape index: {2}]
  %13 = xla_tuple %s10, %s11, %s12
  %s14 = sld [smem:[#allocation0]]
  $region66: #{_lambda_.17} parent=0
    _
  %s16 = ssub.s32 1, %s14
  %s17 = scalar_select 0, %s16, %s14
  // Predicated region
  $region2: #{_lambda_.17} parent=0 // pred_check
    _
  $region3: #{_lambda_.17} parent=0 // pred_check_branch
    %19 = sbr.rel (0) target = $region5
  $region4: #{_lambda_.17} parent=0 // pred_region
    _
  $region5: #{_lambda_.17} parent=0 // pred_fallthru
    _
  // Predicated region
  $region6: #{_lambda_.17} parent=0 // pred_check
    _
  $region7: #{_lambda_.17} parent=0 // pred_check_branch
    %21 = sbr.rel (0) target = $region9
  $region8: #{_lambda_.17} parent=0 // pred_region
    _
  $region9: #{_lambda_.17} parent=0 // pred_fallthru
    _
  // Predicated region
  $region10: #{_lambda_.17} parent=0 // pred_check
    _
  $region11: #{_lambda_.17} parent=0 // pred_check_branch
    %23 = sbr.rel (0) target = $region13
  $region12: #{_lambda_.17} parent=0 // pred_region
    _
  $region13: #{_lambda_.17} parent=0 // pred_fallthru
    _
  // Predicated region
  $region14: #{_lambda_.17} parent=0 // pred_check
    _
  $region15: #{_lambda_.17} parent=0 // pred_check_branch
    %25 = sbr.rel (0) target = $region17
  $region16: #{_lambda_.17} parent=0 // pred_region
    _
  $region17: #{_lambda_.17} parent=0 // pred_fallthru
    _
  // Predicated region
  $region18: #{_lambda_.17} parent=0 // pred_check
    _
  $region19: #{_lambda_.17} parent=0 // pred_check_branch
    %27 = sbr.rel (0) target = $region21
  $region20: #{_lambda_.17} parent=0 // pred_region
    _
  $region21: #{_lambda_.17} parent=0 // pred_fallthru
    _
  // Predicated region
  $region22: #{_lambda_.17} parent=0 // pred_check
    _
  $region23: #{_lambda_.17} parent=0 // pred_check_branch
    %29 = sbr.rel (0) target = $region25
  $region24: #{_lambda_.17} parent=0 // pred_region
    _
  $region25: #{_lambda_.17} parent=0 // pred_fallthru
    _
  // Predicated region
  $region26: #{_lambda_.17} parent=0 // pred_check
    _
  $region27: #{_lambda_.17} parent=0 // pred_check_branch
    %31 = sbr.rel (0) target = $region29
  $region28: #{_lambda_.17} parent=0 // pred_region
    _
  $region29: #{_lambda_.17} parent=0 // pred_fallthru
    _
  // Predicated region
  $region30: #{_lambda_.17} parent=0 // pred_check
    _
  $region31: #{_lambda_.17} parent=0 // pred_check_branch
    %33 = sbr.rel (0) target = $region33
  $region32: #{_lambda_.17} parent=0 // pred_region
    _
  $region33: #{_lambda_.17} parent=0 // pred_fallthru
    _
  // Predicated region
  $region34: #{_lambda_.17} parent=0 // pred_check
    _
  $region35: #{_lambda_.17} parent=0 // pred_check_branch
    %35 = sbr.rel (0) target = $region37
  $region36: #{_lambda_.17} parent=0 // pred_region
    _
  $region37: #{_lambda_.17} parent=0 // pred_fallthru
    _
  // Predicated region
  $region38: #{_lambda_.17} parent=0 // pred_check
    _
  $region39: #{_lambda_.17} parent=0 // pred_check_branch
    %37 = sbr.rel (0) target = $region41
  $region40: #{_lambda_.17} parent=0 // pred_region
    _
  $region41: #{_lambda_.17} parent=0 // pred_fallthru
    _
  %v38 = vld [vmem:[%s0] sm:$0xff]
  %v39 = vld [vmem:[%s0 + $0x8] sm:$0xff]
  %v40 = vld [vmem:[%s1] sm:$0xff]
  %v41 = vld [vmem:[%s1 + $0x8] sm:$0xff]
  %v42 = vld [vmem:[%s1 + $0x10] sm:$0xff]
  %v43 = vld [vmem:[%s1 + $0x18] sm:$0xff]
  %v44 = vld [vmem:[%s4] sm:$0xff]
  %v45 = vld [vmem:[%s4 + $0x8] sm:$0xff]
  %v46 = vld [vmem:[%s4 + $0x10] sm:$0xff]
  %v47 = vld [vmem:[%s4 + $0x18] sm:$0xff]
  %vm48 = vcmask 261120
  %v50 = vsel %vm48, %v38, 0
  %v53 = vsel %vm48, %v39, 0
  %55 = vmatpush.msra.mxu0 0.0
  %56 = vmatpush.msra.mxu0 0.0
  %57 = vmatpush.msra.mxu0 0.0
  %58 = vmatpush.msra.mxu0 0.0
  %59 = vmatpush.msra.mxu0 0.0
  %60 = vmatpush.msra.mxu0 0.0
  %61 = vmatpush.msra.mxu0 0.0
  %62 = vmatpush.msra.mxu0 0.0
  %63 = vmatpush.msra.mxu0 0.0
  %64 = vmatpush.msra.mxu0 0.0
  %65 = vmatpush.msra.mxu0 0.0
  %66 = vmatpush.msra.mxu0 0.0
  %67 = vmatpush.msra.mxu0 %v47
  %68 = vmatpush.msra.mxu0 %v46
  %69 = vmatpush.msra.mxu0 %v45
  %70 = vmatpush.msra.mxu0 %v44
  %71 = vmatmul.f32.gmra.mxu0 %v50
  %v72 = vpop.f32.mrf.mxu0
  %v73 = vadd.f32 0.0, %v72
  %74 = vmatmul.f32.gmra.mxu0 %v53
  %v75 = vpop.f32.mrf.mxu0
  %v76 = vadd.f32 0.0, %v75
  %77 = vdwg.mxu0
  %v78 = vld [vmem:[%s5] sm:$0xff]
  %vm79 = vcmask 64512
  %v81 = vsel %vm79, %v73, 0
  %v84 = vsel %vm79, %v76, 0
  %86 = vmatpush.msra.mxu0 0.0
  %87 = vmatpush.msra.mxu0 0.0
  %88 = vmatpush.msra.mxu0 0.0
  %89 = vmatpush.msra.mxu0 0.0
  %90 = vmatpush.msra.mxu0 0.0
  %91 = vmatpush.msra.mxu0 0.0
  %92 = vmatpush.msra.mxu0 0.0
  %93 = vmatpush.msra.mxu0 0.0
  %94 = vmatpush.msra.mxu0 0.0
  %95 = vmatpush.msra.mxu0 0.0
  %96 = vmatpush.msra.mxu0 0.0
  %97 = vmatpush.msra.mxu0 0.0
  %98 = vmatpush.msra.mxu0 0.0
  %99 = vmatpush.msra.mxu0 0.0
  %100 = vmatpush.msra.mxu0 0.0
  %101 = vmatpush.msra.mxu0 %v78
  %102 = vmatmul.f32.gmra.mxu0 %v81
  %v103 = vpop.f32.mrf.mxu0
  %v104 = vadd.f32 0.0, %v103
  %105 = vmatmul.f32.gmra.mxu0 %v84
  %v106 = vpop.f32.mrf.mxu0
  %v107 = vadd.f32 0.0, %v106
  %108 = vdwg.mxu0
  %v109 = vmul.f32 %v104, 2.0
  %v110 = vmul.f32 %v107, 2.0
  %111 = vmatpush.msra.mxu0 0.0
  %112 = vmatpush.msra.mxu0 0.0
  %113 = vmatpush.msra.mxu0 0.0
  %114 = vmatpush.msra.mxu0 0.0
  %115 = vmatpush.msra.mxu0 0.0
  %116 = vmatpush.msra.mxu0 0.0
  %117 = vmatpush.msra.mxu0 0.0
  %118 = vmatpush.msra.mxu0 0.0
  %119 = vmatpush.msra.mxu0 0.0
  %120 = vmatpush.msra.mxu0 0.0
  %121 = vmatpush.msra.mxu0 0.0
  %122 = vmatpush.msra.mxu0 0.0
  %123 = vmatpush.msra.mxu0 %v43
  %124 = vmatpush.msra.mxu0 %v42
  %125 = vmatpush.msra.mxu0 %v41
  %126 = vmatpush.msra.mxu0 %v40
  %127 = vmatmul.f32.gmra.mxu0 %v50
  %v128 = vpop.f32.mrf.mxu0
  %v129 = vadd.f32 %v109, %v128
  %130 = vmatmul.f32.gmra.mxu0 %v53
  %v131 = vpop.f32.mrf.mxu0
  %v132 = vadd.f32 %v110, %v131
  %133 = vdwg.mxu0
  %134 = vst.msk [vmem:[%s10] sm:$0xff] %vm48, %v129
  %135 = vst.msk [vmem:[%s10 + $0x8] sm:$0xff] %vm48, %v132
  %v136 = vld [vmem:[%s2] sm:$0xff]
  %v137 = vld [vmem:[%s2 + $0x8] sm:$0xff]
  %v138 = vld [vmem:[%s2 + $0x10] sm:$0xff]
  %v139 = vld [vmem:[%s2 + $0x18] sm:$0xff]
  %v140 = vld [vmem:[%s6] sm:$0xff]
  %v141 = vld [vmem:[%s6 + $0x8] sm:$0xff]
  %v142 = vld [vmem:[%s6 + $0x10] sm:$0xff]
  %v143 = vld [vmem:[%s6 + $0x18] sm:$0xff]
  %144 = vmatpush.msra.mxu0 0.0
  %145 = vmatpush.msra.mxu0 0.0
  %146 = vmatpush.msra.mxu0 0.0
  %147 = vmatpush.msra.mxu0 0.0
  %148 = vmatpush.msra.mxu0 0.0
  %149 = vmatpush.msra.mxu0 0.0
  %150 = vmatpush.msra.mxu0 0.0
  %151 = vmatpush.msra.mxu0 0.0
  %152 = vmatpush.msra.mxu0 0.0
  %153 = vmatpush.msra.mxu0 0.0
  %154 = vmatpush.msra.mxu0 0.0
  %155 = vmatpush.msra.mxu0 0.0
  %156 = vmatpush.msra.mxu0 %v143
  %157 = vmatpush.msra.mxu0 %v142
  %158 = vmatpush.msra.mxu0 %v141
  %159 = vmatpush.msra.mxu0 %v140
  %160 = vmatmul.f32.gmra.mxu0 %v50
  %v161 = vpop.f32.mrf.mxu0
  %v162 = vadd.f32 0.0, %v161
  %163 = vmatmul.f32.gmra.mxu0 %v53
  %v164 = vpop.f32.mrf.mxu0
  %v165 = vadd.f32 0.0, %v164
  %166 = vdwg.mxu0
  %v167 = vld [vmem:[%s7] sm:$0xff]
  %v169 = vsel %vm79, %v162, 0
  %v172 = vsel %vm79, %v165, 0
  %174 = vmatpush.msra.mxu0 0.0
  %175 = vmatpush.msra.mxu0 0.0
  %176 = vmatpush.msra.mxu0 0.0
  %177 = vmatpush.msra.mxu0 0.0
  %178 = vmatpush.msra.mxu0 0.0
  %179 = vmatpush.msra.mxu0 0.0
  %180 = vmatpush.msra.mxu0 0.0
  %181 = vmatpush.msra.mxu0 0.0
  %182 = vmatpush.msra.mxu0 0.0
  %183 = vmatpush.msra.mxu0 0.0
  %184 = vmatpush.msra.mxu0 0.0
  %185 = vmatpush.msra.mxu0 0.0
  %186 = vmatpush.msra.mxu0 0.0
  %187 = vmatpush.msra.mxu0 0.0
  %188 = vmatpush.msra.mxu0 0.0
  %189 = vmatpush.msra.mxu0 %v167
  %190 = vmatmul.f32.gmra.mxu0 %v169
  %v191 = vpop.f32.mrf.mxu0
  %v192 = vadd.f32 0.0, %v191
  %193 = vmatmul.f32.gmra.mxu0 %v172
  %v194 = vpop.f32.mrf.mxu0
  %v195 = vadd.f32 0.0, %v194
  %196 = vdwg.mxu0
  %v197 = vmul.f32 %v192, 2.0
  %v198 = vmul.f32 %v195, 2.0
  %199 = vmatpush.msra.mxu0 0.0
  %200 = vmatpush.msra.mxu0 0.0
  %201 = vmatpush.msra.mxu0 0.0
  %202 = vmatpush.msra.mxu0 0.0
  %203 = vmatpush.msra.mxu0 0.0
  %204 = vmatpush.msra.mxu0 0.0
  %205 = vmatpush.msra.mxu0 0.0
  %206 = vmatpush.msra.mxu0 0.0
  %207 = vmatpush.msra.mxu0 0.0
  %208 = vmatpush.msra.mxu0 0.0
  %209 = vmatpush.msra.mxu0 0.0
  %210 = vmatpush.msra.mxu0 0.0
  %211 = vmatpush.msra.mxu0 %v139
  %212 = vmatpush.msra.mxu0 %v138
  %213 = vmatpush.msra.mxu0 %v137
  %214 = vmatpush.msra.mxu0 %v136
  %215 = vmatmul.f32.gmra.mxu0 %v50
  %v216 = vpop.f32.mrf.mxu0
  %v217 = vadd.f32 %v197, %v216
  %218 = vmatmul.f32.gmra.mxu0 %v53
  %v219 = vpop.f32.mrf.mxu0
  %v220 = vadd.f32 %v198, %v219
  %221 = vdwg.mxu0
  %vm222 = vcmask 130048
  %223 = vst.msk [vmem:[%s11] sm:$0xff] %vm222, %v217
  %224 = vst.msk [vmem:[%s11 + $0x8] sm:$0xff] %vm222, %v220
  %v225 = vld [vmem:[%s3] sm:$0xff]
  %v226 = vld [vmem:[%s3 + $0x8] sm:$0xff]
  %v227 = vld [vmem:[%s3 + $0x10] sm:$0xff]
  %v228 = vld [vmem:[%s3 + $0x18] sm:$0xff]
  %v229 = vld [vmem:[%s8] sm:$0xff]
  %v230 = vld [vmem:[%s8 + $0x8] sm:$0xff]
  %v231 = vld [vmem:[%s8 + $0x10] sm:$0xff]
  %v232 = vld [vmem:[%s8 + $0x18] sm:$0xff]
  %233 = vmatpush.msra.mxu0 0.0
  %234 = vmatpush.msra.mxu0 0.0
  %235 = vmatpush.msra.mxu0 0.0
  %236 = vmatpush.msra.mxu0 0.0
  %237 = vmatpush.msra.mxu0 0.0
  %238 = vmatpush.msra.mxu0 0.0
  %239 = vmatpush.msra.mxu0 0.0
  %240 = vmatpush.msra.mxu0 0.0
  %241 = vmatpush.msra.mxu0 0.0
  %242 = vmatpush.msra.mxu0 0.0
  %243 = vmatpush.msra.mxu0 0.0
  %244 = vmatpush.msra.mxu0 0.0
  %245 = vmatpush.msra.mxu0 %v232
  %246 = vmatpush.msra.mxu0 %v231
  %247 = vmatpush.msra.mxu0 %v230
  %248 = vmatpush.msra.mxu0 %v229
  %249 = vmatmul.f32.gmra.mxu0 %v50
  %v250 = vpop.f32.mrf.mxu0
  %v251 = vadd.f32 0.0, %v250
  %252 = vmatmul.f32.gmra.mxu0 %v53
  %v253 = vpop.f32.mrf.mxu0
  %v254 = vadd.f32 0.0, %v253
  %255 = vdwg.mxu0
  %v256 = vld [vmem:[%s9] sm:$0xff]
  %v258 = vsel %vm79, %v251, 0
  %v261 = vsel %vm79, %v254, 0
  %263 = vmatpush.msra.mxu0 0.0
  %264 = vmatpush.msra.mxu0 0.0
  %265 = vmatpush.msra.mxu0 0.0
  %266 = vmatpush.msra.mxu0 0.0
  %267 = vmatpush.msra.mxu0 0.0
  %268 = vmatpush.msra.mxu0 0.0
  %269 = vmatpush.msra.mxu0 0.0
  %270 = vmatpush.msra.mxu0 0.0
  %271 = vmatpush.msra.mxu0 0.0
  %272 = vmatpush.msra.mxu0 0.0
  %273 = vmatpush.msra.mxu0 0.0
  %274 = vmatpush.msra.mxu0 0.0
  %275 = vmatpush.msra.mxu0 0.0
  %276 = vmatpush.msra.mxu0 0.0
  %277 = vmatpush.msra.mxu0 0.0
  %278 = vmatpush.msra.mxu0 %v256
  %279 = vmatmul.f32.gmra.mxu0 %v258
  %v280 = vpop.f32.mrf.mxu0
  %v281 = vadd.f32 0.0, %v280
  %282 = vmatmul.f32.gmra.mxu0 %v261
  %v283 = vpop.f32.mrf.mxu0
  %v284 = vadd.f32 0.0, %v283
  %285 = vdwg.mxu0
  %v286 = vmul.f32 %v281, 2.0
  %v287 = vmul.f32 %v284, 2.0
  %288 = vmatpush.msra.mxu0 0.0
  %289 = vmatpush.msra.mxu0 0.0
  %290 = vmatpush.msra.mxu0 0.0
  %291 = vmatpush.msra.mxu0 0.0
  %292 = vmatpush.msra.mxu0 0.0
  %293 = vmatpush.msra.mxu0 0.0
  %294 = vmatpush.msra.mxu0 0.0
  %295 = vmatpush.msra.mxu0 0.0
  %296 = vmatpush.msra.mxu0 0.0
  %297 = vmatpush.msra.mxu0 0.0
  %298 = vmatpush.msra.mxu0 0.0
  %299 = vmatpush.msra.mxu0 0.0
  %300 = vmatpush.msra.mxu0 %v228
  %301 = vmatpush.msra.mxu0 %v227
  %302 = vmatpush.msra.mxu0 %v226
  %303 = vmatpush.msra.mxu0 %v225
  %304 = vmatmul.f32.gmra.mxu0 %v50
  %v305 = vpop.f32.mrf.mxu0
  %v306 = vadd.f32 %v286, %v305
  %307 = vmatmul.f32.gmra.mxu0 %v53
  %v308 = vpop.f32.mrf.mxu0
  %v309 = vadd.f32 %v287, %v308
  %310 = vdwg.mxu0
  %311 = vst.msk [vmem:[%s12] sm:$0xff] %vm222, %v306
  %312 = vst.msk [vmem:[%s12 + $0x8] sm:$0xff] %vm222, %v309
  // Predicated region
  $region42: #{_lambda_.17} parent=0 // pred_check
    _
  $region43: #{_lambda_.17} parent=0 // pred_check_branch
    %314 = sbr.rel (0) target = $region45
  $region44: #{_lambda_.17} parent=0 // pred_region
    _
  $region45: #{_lambda_.17} parent=0 // pred_fallthru
    _
  // Predicated region
  $region46: #{_lambda_.17} parent=0 // pred_check
    _
  $region47: #{_lambda_.17} parent=0 // pred_check_branch
    %316 = sbr.rel (0) target = $region49
  $region48: #{_lambda_.17} parent=0 // pred_region
    _
  $region49: #{_lambda_.17} parent=0 // pred_fallthru
    _
  // Predicated region
  $region50: #{_lambda_.17} parent=0 // pred_check
    _
  $region51: #{_lambda_.17} parent=0 // pred_check_branch
    %318 = sbr.rel (0) target = $region53
  $region52: #{_lambda_.17} parent=0 // pred_region
    _
  $region53: #{_lambda_.17} parent=0 // pred_fallthru
    _
  // Predicated region
  $region54: #{_lambda_.17} parent=0 // pred_check
    _
  $region55: #{_lambda_.17} parent=0 // pred_check_branch
    %320 = sbr.rel (0) target = $region57
  $region56: #{_lambda_.17} parent=0 // pred_region
    _
  $region57: #{_lambda_.17} parent=0 // pred_fallthru
    _
  // Predicated region
  $region58: #{_lambda_.17} parent=0 // pred_check
    _
  $region59: #{_lambda_.17} parent=0 // pred_check_branch
    %322 = sbr.rel (0) target = $region61
  $region60: #{_lambda_.17} parent=0 // pred_region
    _
  $region61: #{_lambda_.17} parent=0 // pred_fallthru
    _
  // Predicated region
  $region62: #{_lambda_.17} parent=0 // pred_check
    _
  $region63: #{_lambda_.17} parent=0 // pred_check_branch
    %324 = sbr.rel (0) target = $region65
  $region64: #{_lambda_.17} parent=0 // pred_region
    _
  $region65: #{_lambda_.17} parent=0 // pred_fallthru
    _

// kernel: _lambda_.18
$region0: #{_lambda_.18}
  #allocation0 [shape = 'u32[]', space=smem, size = 0x4, offset = 0x4, fixed_abs, tag = 'smem constant byte address 0x4 - core index']
  #allocation1 [shape = 'u32[72,128]{1,0:T(1,128)}', space=vmem, size = 0x9000, scoped, tag = 'internal scratch']
  %s0 = inlined_call_operand.vmem [shape: f32[2,4,8,8], index: 0, kind: input, shape index: {}]
  %s1 = inlined_call_operand.vmem [shape: f32[2,4,8,8], index: 1, kind: input, shape index: {}]
  %s2 = inlined_call_operand.vmem [shape: f32[2,4,8,8], index: 2, kind: input, shape index: {}]
  %s3 = inlined_call_operand.vmem [shape: f32[8,8], index: 3, kind: input, shape index: {}]
  %s4 = inlined_call_operand.vmem [shape: f32[2,4,8,8], index: 4, kind: output, shape index: {}]
  %s5 = sld [smem:[#allocation0]]
  $region49: #{_lambda_.18} parent=0
    _
  %s7 = ssub.s32 1, %s5
  %s8 = scalar_select 0, %s7, %s5
  loop: start=0, step=1, limit=10
  $region2: #{_lambda_.18} parent=0 // loop_pre_header
    _
  $region3: #{_lambda_.18} parent=0 // loop_header
    %s10 = sphi 0, %s14
    %p11 = scmp.ge.s32.totalorder %s10, 10
    %s17 = sphi 0, %s29
    %s18 = sphi 0, %s25
    %s19 = sphi 0, %s17
    %s20 = sphi 0, %s18
    %s21 = sphi 0, %s19
    %s22 = sphi 0, %s20
    %s34 = sphi 0, %s36
    %s37 = sphi 0, %s34
    %s38 = sphi 0, %s37
    %s54 = sphi 0, %s38
    %s62 = sphi 0, %s64
    %s65 = sphi 0, %s62
    %s66 = sphi 0, %s65
    %s82 = sphi 0, %s66
    %s90 = sphi 0, %s92
    %s93 = sphi 0, %s90
    %s94 = sphi 0, %s93
    %s110 = sphi 0, %s94
    %s114 = sphi 0, %s114
    %s116 = sphi 0, %s114
    %s117 = sphi 0, %s116
    %s131 = sphi 0, %s117
    %s139 = sphi 0, %s141
    %s142 = sphi 0, %s139
    %s143 = sphi 0, %s142
    %s159 = sphi 0, %s143
  $region4: #{_lambda_.18} parent=0 // loop_header_branch
    %13 = sbr.rel (%p11) target = $region8
  $region5: #{_lambda_.18} parent=0 // loop_body
    %s15 = ssub.s32 %s10, 1
    %s16 = ssub.s32 %s10, 2
    %s23 = sadd.s32 1, %s18
    %p24 = scmp.ge.s32.totalorder %s23, 4
    %s25 = scalar_select %p24, 0, %s23
    %s26 = sadd.s32 1, %s17
    %s27 = scalar_select %p24, %s26, %s17
    %p28 = scmp.ge.s32.totalorder %s27, 2
    %s29 = scalar_select %p28, 0, %s27
    %s30 = ssub.s32 %s17, %s29
    %s31 = ssub.s32 %s18, %s25
    %s32 = sor.u32 %s30, %s31
    %p33 = scmp.eq.s32.totalorder %s32, 0
    %s35 = sadd.s32 %s34, 1
    %s36 = scalar_select %p33, %s34, %s35
    %p39 = pneg %p33
    %p40 = scmp.eq.s32.totalorder %s10, 7
    %p41 = por %p39, %p40
    %p42 = scmp.ne.s32.totalorder %s34, %s37
    %p43 = scmp.eq.s32.totalorder %s10, 0
    %p44 = por %p42, %p43
    %p45 = scmp.ne.s32.totalorder %s34, %s37
    %p46 = scmp.eq.s32.totalorder %s15, 7
    %p47 = por %p45, %p46
    %p48 = scmp.ne.s32.totalorder %s37, %s38
    %p49 = scmp.eq.s32.totalorder %s15, 0
    %p50 = por %p48, %p49
    %p51 = scmp.ne.s32.totalorder %s37, %s38
    %p52 = scmp.eq.s32.totalorder %s16, 7
    %p53 = por %p51, %p52
    %p55 = scmp.ne.s32.totalorder %s38, %s54
    %p56 = scmp.eq.s32.totalorder %s16, 0
    %p57 = por %p55, %p56
    %s58 = ssub.s32 %s17, %s29
    %s59 = ssub.s32 %s18, %s25
    %s60 = sor.u32 %s58, %s59
    %p61 = scmp.eq.s32.totalorder %s60, 0
    %s63 = sadd.s32 %s62, 1
    %s64 = scalar_select %p61, %s62, %s63
    %p67 = pneg %p61
    %p68 = scmp.eq.s32.totalorder %s10, 7
    %p69 = por %p67, %p68
    %p70 = scmp.ne.s32.totalorder %s62, %s65
    %p71 = scmp.eq.s32.totalorder %s10, 0
    %p72 = por %p70, %p71
    %p73 = scmp.ne.s32.totalorder %s62, %s65
    %p74 = scmp.eq.s32.totalorder %s15, 7
    %p75 = por %p73, %p74
    %p76 = scmp.ne.s32.totalorder %s65, %s66
    %p77 = scmp.eq.s32.totalorder %s15, 0
    %p78 = por %p76, %p77
    %p79 = scmp.ne.s32.totalorder %s65, %s66
    %p80 = scmp.eq.s32.totalorder %s16, 7
    %p81 = por %p79, %p80
    %p83 = scmp.ne.s32.totalorder %s66, %s82
    %p84 = scmp.eq.s32.totalorder %s16, 0
    %p85 = por %p83, %p84
    %s86 = ssub.s32 %s17, %s29
    %s87 = ssub.s32 %s18, %s25
    %s88 = sor.u32 %s86, %s87
    %p89 = scmp.eq.s32.totalorder %s88, 0
    %s91 = sadd.s32 %s90, 1
    %s92 = scalar_select %p89, %s90, %s91
    %p95 = pneg %p89
    %p96 = scmp.eq.s32.totalorder %s10, 7
    %p97 = por %p95, %p96
    %p98 = scmp.ne.s32.totalorder %s90, %s93
    %p99 = scmp.eq.s32.totalorder %s10, 0
    %p100 = por %p98, %p99
    %p101 = scmp.ne.s32.totalorder %s90, %s93
    %p102 = scmp.eq.s32.totalorder %s15, 7
    %p103 = por %p101, %p102
    %p104 = scmp.ne.s32.totalorder %s93, %s94
    %p105 = scmp.eq.s32.totalorder %s15, 0
    %p106 = por %p104, %p105
    %p107 = scmp.ne.s32.totalorder %s93, %s94
    %p108 = scmp.eq.s32.totalorder %s16, 7
    %p109 = por %p107, %p108
    %p111 = scmp.ne.s32.totalorder %s94, %s110
    %p112 = scmp.eq.s32.totalorder %s16, 0
    %p113 = por %p111, %p112
    %s115 = sadd.s32 %s114, 1
    %p118 = scmp.eq.s32.totalorder %s10, 7
    %p119 = scmp.ne.s32.totalorder %s114, %s116
    %p120 = scmp.eq.s32.totalorder %s10, 0
    %p121 = por %p119, %p120
    %p122 = scmp.ne.s32.totalorder %s114, %s116
    %p123 = scmp.eq.s32.totalorder %s15, 7
    %p124 = por %p122, %p123
    %p125 = scmp.ne.s32.totalorder %s116, %s117
    %p126 = scmp.eq.s32.totalorder %s15, 0
    %p127 = por %p125, %p126
    %p128 = scmp.ne.s32.totalorder %s116, %s117
    %p129 = scmp.eq.s32.totalorder %s16, 7
    %p130 = por %p128, %p129
    %p132 = scmp.ne.s32.totalorder %s117, %s131
    %p133 = scmp.eq.s32.totalorder %s16, 0
    %p134 = por %p132, %p133
    %s135 = ssub.s32 %s17, %s29
    %s136 = ssub.s32 %s18, %s25
    %s137 = sor.u32 %s135, %s136
    %p138 = scmp.eq.s32.totalorder %s137, 0
    %s140 = sadd.s32 %s139, 1
    %s141 = scalar_select %p138, %s139, %s140
    %p144 = pneg %p138
    %p145 = scmp.eq.s32.totalorder %s10, 7
    %p146 = por %p144, %p145
    %p147 = scmp.ne.s32.totalorder %s139, %s142
    %p148 = scmp.eq.s32.totalorder %s10, 0
    %p149 = por %p147, %p148
    %p150 = scmp.ne.s32.totalorder %s139, %s142
    %p151 = scmp.eq.s32.totalorder %s15, 7
    %p152 = por %p150, %p151
    %p153 = scmp.ne.s32.totalorder %s142, %s143
    %p154 = scmp.eq.s32.totalorder %s15, 0
    %p155 = por %p153, %p154
    %p156 = scmp.ne.s32.totalorder %s142, %s143
    %p157 = scmp.eq.s32.totalorder %s16, 7
    %p158 = por %p156, %p157
    %p160 = scmp.ne.s32.totalorder %s143, %s159
    %p161 = scmp.eq.s32.totalorder %s16, 0
    %p162 = por %p160, %p161
    %p163 = scmp.le.s32.totalorder 1, %s10
    %p164 = scmp.lt.s32.totalorder %s10, 9
    %p165 = pnand %p163, %p164
    %p166 = pneg %p165
    // Predicated region
    $region9: #{_lambda_.18} parent=5 // pred_check
      _
    $region10: #{_lambda_.18} parent=5 // pred_check_branch
      %168 = sbr.rel (%p165) target = $region12
    $region11: #{_lambda_.18} parent=5 // pred_region
      %s169 = ssub.s32 %s10, 1
      // Predicated region
      $region13: #{_lambda_.18} parent=11 // pred_check
        %p170 = pneg %p127
      $region14: #{_lambda_.18} parent=11 // pred_check_branch
        %172 = sbr.rel (%p170) target = $region16
      $region15: #{_lambda_.18} parent=11 // pred_region
        _
      $region16: #{_lambda_.18} parent=11 // pred_fallthru
        _
    $region12: #{_lambda_.18} parent=5 // pred_fallthru
      _
    %p173 = scmp.lt.s32.totalorder %s10, 8
    // Predicated region
    $region17: #{_lambda_.18} parent=5 // pred_check
      %p174 = pneg %p173
    $region18: #{_lambda_.18} parent=5 // pred_check_branch
      %176 = sbr.rel (%p174) target = $region20
    $region19: #{_lambda_.18} parent=5 // pred_region
      // Predicated region
      $region21: #{_lambda_.18} parent=19 // pred_check
        %p177 = pneg %p44
      $region22: #{_lambda_.18} parent=19 // pred_check_branch
        %179 = sbr.rel (%p177) target = $region24
      $region23: #{_lambda_.18} parent=19 // pred_region
        %p180 = scmp.lt.s32.totalorder %s17, 1
        %s181 = scalar_select %p180, %s17, 1
        %p182 = scmp.lt.s32.totalorder %s18, 3
        %s183 = scalar_select %p182, %s18, 3
        %s184 = smul.addr %s181, 4
        %s185 = sadd.s32 %s183, %s184
        %s186 = smul.addr %s185, 8
        %s187 = scalar_lea.vmem %s0, %s186
      $region24: #{_lambda_.18} parent=19 // pred_fallthru
        _
      // Predicated region
      $region25: #{_lambda_.18} parent=19 // pred_check
        %p188 = pneg %p72
      $region26: #{_lambda_.18} parent=19 // pred_check_branch
        %190 = sbr.rel (%p188) target = $region28
      $region27: #{_lambda_.18} parent=19 // pred_region
        %p191 = scmp.lt.s32.totalorder %s17, 1
        %s192 = scalar_select %p191, %s17, 1
        %p193 = scmp.lt.s32.totalorder %s18, 3
        %s194 = scalar_select %p193, %s18, 3
        %s195 = smul.addr %s192, 4
        %s196 = sadd.s32 %s194, %s195
        %s197 = smul.addr %s196, 8
        %s198 = scalar_lea.vmem %s1, %s197
      $region28: #{_lambda_.18} parent=19 // pred_fallthru
        _
      // Predicated region
      $region29: #{_lambda_.18} parent=19 // pred_check
        %p199 = pneg %p100
      $region30: #{_lambda_.18} parent=19 // pred_check_branch
        %201 = sbr.rel (%p199) target = $region32
      $region31: #{_lambda_.18} parent=19 // pred_region
        %p202 = scmp.lt.s32.totalorder %s17, 1
        %s203 = scalar_select %p202, %s17, 1
        %p204 = scmp.lt.s32.totalorder %s18, 3
        %s205 = scalar_select %p204, %s18, 3
        %s206 = smul.addr %s203, 4
        %s207 = sadd.s32 %s205, %s206
        %s208 = smul.addr %s207, 8
        %s209 = scalar_lea.vmem %s2, %s208
      $region32: #{_lambda_.18} parent=19 // pred_fallthru
        _
    $region20: #{_lambda_.18} parent=5 // pred_fallthru
      _
    %p210 = scmp.le.s32.totalorder 1, %s10
    %p211 = scmp.lt.s32.totalorder %s10, 9
    %p212 = pnand %p210, %p211
    %p213 = pneg %p212
    // Predicated region
    $region33: #{_lambda_.18} parent=5 // pred_check
      _
    $region34: #{_lambda_.18} parent=5 // pred_check_branch
      %215 = sbr.rel (%p212) target = $region36
    $region35: #{_lambda_.18} parent=5 // pred_region
      %s216 = ssub.s32 %s10, 1
      %p217 = scmp.lt.s32.totalorder %s19, 1
      %s218 = scalar_select %p217, %s19, 1
      %p219 = scmp.lt.s32.totalorder %s20, 3
      %s220 = scalar_select %p219, %s20, 3
      %s221 = smul.addr %s218, 4
      %s222 = sadd.s32 %s220, %s221
      %s223 = smul.addr %s222, 8
      %s224 = scalar_lea.vmem %s0, %s223
      %p225 = pneg %p50
      %p226 = pneg %p47
      %p227 = scmp.lt.s32.totalorder %s19, 1
      %s228 = scalar_select %p227, %s19, 1
      %p229 = scmp.lt.s32.totalorder %s20, 3
      %s230 = scalar_select %p229, %s20, 3
      %s231 = smul.addr %s228, 4
      %s232 = sadd.s32 %s230, %s231
      %s233 = smul.addr %s232, 8
      %s234 = scalar_lea.vmem %s1, %s233
      %p235 = pneg %p78
      %p236 = pneg %p75
      %p237 = scmp.lt.s32.totalorder %s19, 1
      %s238 = scalar_select %p237, %s19, 1
      %p239 = scmp.lt.s32.totalorder %s20, 3
      %s240 = scalar_select %p239, %s20, 3
      %s241 = smul.addr %s238, 4
      %s242 = sadd.s32 %s240, %s241
      %s243 = smul.addr %s242, 8
      %s244 = scalar_lea.vmem %s2, %s243
      %p245 = pneg %p106
      %p246 = pneg %p103
      %p247 = pneg %p127
      %p248 = pneg %p124
      %p249 = pneg %p155
      %p250 = pneg %p152
      %p251 = scmp.lt.s32.totalorder %s19, 1
      %s252 = scalar_select %p251, %s19, 1
      %p253 = scmp.lt.s32.totalorder %s20, 3
      %s254 = scalar_select %p253, %s20, 3
      %s255 = smul.addr %s252, 4
      %s256 = sadd.s32 %s254, %s255
      %s257 = smul.addr %s256, 8
      %s258 = scalar_lea.vmem %s4, %s257
      %p259 = scmp.lt.s32.totalorder %s19, 1
      %s260 = scalar_select %p259, %s19, 1
      %p261 = scmp.lt.s32.totalorder %s20, 3
      %s262 = scalar_select %p261, %s20, 3
      %s263 = smul.addr %s260, 4
      %s264 = sadd.s32 %s262, %s263
      %s265 = smul.addr %s264, 8
      %s266 = scalar_lea.vmem %s0, %s265
      %p267 = scmp.lt.s32.totalorder %s19, 1
      %s268 = scalar_select %p267, %s19, 1
      %p269 = scmp.lt.s32.totalorder %s20, 3
      %s270 = scalar_select %p269, %s20, 3
      %s271 = smul.addr %s268, 4
      %s272 = sadd.s32 %s270, %s271
      %s273 = smul.addr %s272, 8
      %s274 = scalar_lea.vmem %s1, %s273
      %p275 = scmp.lt.s32.totalorder %s19, 1
      %s276 = scalar_select %p275, %s19, 1
      %p277 = scmp.lt.s32.totalorder %s20, 3
      %s278 = scalar_select %p277, %s20, 3
      %s279 = smul.addr %s276, 4
      %s280 = sadd.s32 %s278, %s279
      %s281 = smul.addr %s280, 8
      %s282 = scalar_lea.vmem %s2, %s281
      %p283 = scmp.lt.s32.totalorder %s19, 1
      %s284 = scalar_select %p283, %s19, 1
      %p285 = scmp.lt.s32.totalorder %s20, 3
      %s286 = scalar_select %p285, %s20, 3
      %s287 = smul.addr %s284, 4
      %s288 = sadd.s32 %s286, %s287
      %s289 = smul.addr %s288, 8
      %s290 = scalar_lea.vmem %s4, %s289
      %v291 = vld [vmem:[%s266] sm:$0xff]
      %v292 = vld [vmem:[%s274] sm:$0xff]
      %v293 = vld [vmem:[%s282] sm:$0xff]
      %vm294 = vcmask 64512
      %v296 = vsel %vm294, %v291, 0
      %v299 = vsel %vm294, %v292, 0
      %301 = vmatpush.xpose.msra.mxu0 0.0
      %302 = vmatpush.xpose.msra.mxu0 0.0
      %303 = vmatpush.xpose.msra.mxu0 0.0
      %304 = vmatpush.xpose.msra.mxu0 0.0
      %305 = vmatpush.xpose.msra.mxu0 0.0
      %306 = vmatpush.xpose.msra.mxu0 0.0
      %307 = vmatpush.xpose.msra.mxu0 0.0
      %308 = vmatpush.xpose.msra.mxu0 0.0
      %309 = vmatpush.xpose.msra.mxu0 0.0
      %310 = vmatpush.xpose.msra.mxu0 0.0
      %311 = vmatpush.xpose.msra.mxu0 0.0
      %312 = vmatpush.xpose.msra.mxu0 0.0
      %313 = vmatpush.xpose.msra.mxu0 0.0
      %314 = vmatpush.xpose.msra.mxu0 0.0
      %315 = vmatpush.xpose.msra.mxu0 0.0
      %316 = vmatpush.xpose.msra.mxu0 %v299
      %317 = vmatmul.f32.gmra.mxu0 %v296
      %v318 = vpop.f32.mrf.mxu0
      %v319 = vadd.f32 0.0, %v318
      %320 = vdwg.mxu0
      %v321 = vmul.f32 %v319, 0.35355338
      %v322 = vld [vmem:[%s3] sm:$0xff]
      %v323 = vadd.f32 %v321, %v322
      %v324 = vsel %vm294, %v323, -inf
      %325 = vmax.xlane.f32.xlu0 %v324
      %v326 = vpop.xlane.xlu0 %325
      %v327 = vsub.f32 %v323, %v326
      %v328 = vmul.f32 %v327, 1.442695
      %v329 = vpow.pop %v328
      %v330 = vsel %vm294, %v329, 0.0
      %331 = vadd.xlane.f32.xlu0 %v330
      %v332 = vpop.xlane.xlu0 %331
      %v333 = vrcp.pop %v332
      %v334 = vmul.f32 %v332, %v333
      %v335 = vsub.f32 1.0, %v334
      %v336 = vmul.f32 %v333, %v335
      %v337 = vadd.f32 %v333, %v336
      %vm338 = vweird.f32 %v332
      %vm339 = vweird.f32 %v333
      %vm340 = vmor %vm338, %vm339
      %v341 = vsel %vm340, %v333, %v337
      %v342 = vand.u32 2147483647, %v332
      %vm343 = vcmp.eq.f32.partialorder %v342, 8.507059e+37
      %v344 = vand.u32 %v332, 2147483648
      %v345 = vor.u32 1.1754944e-38, %v344
      %v346 = vsel %vm343, %v345, %v341
      %v347 = vmul.f32 %v329, %v346
      %v349 = vsel %vm294, %v347, 0
      %351 = vmatpush.msra.mxu0 0.0
      %352 = vmatpush.msra.mxu0 0.0
      %353 = vmatpush.msra.mxu0 0.0
      %354 = vmatpush.msra.mxu0 0.0
      %355 = vmatpush.msra.mxu0 0.0
      %356 = vmatpush.msra.mxu0 0.0
      %357 = vmatpush.msra.mxu0 0.0
      %358 = vmatpush.msra.mxu0 0.0
      %359 = vmatpush.msra.mxu0 0.0
      %360 = vmatpush.msra.mxu0 0.0
      %361 = vmatpush.msra.mxu0 0.0
      %362 = vmatpush.msra.mxu0 0.0
      %363 = vmatpush.msra.mxu0 0.0
      %364 = vmatpush.msra.mxu0 0.0
      %365 = vmatpush.msra.mxu0 0.0
      %366 = vmatpush.msra.mxu0 %v293
      %367 = vmatmul.f32.gmra.mxu0 %v349
      %v368 = vpop.f32.mrf.mxu0
      %v369 = vadd.f32 0.0, %v368
      %370 = vdwg.mxu0
      %371 = vst.msk [vmem:[%s290] sm:$0xff] %vm294, %v369
      %p372 = scmp.lt.s32.totalorder %s19, 1
      %s373 = scalar_select %p372, %s19, 1
      %p374 = scmp.lt.s32.totalorder %s20, 3
      %s375 = scalar_select %p374, %s20, 3
      %s376 = smul.addr %s373, 4
      %s377 = sadd.s32 %s375, %s376
      %s378 = smul.addr %s377, 8
      %s379 = scalar_lea.vmem %s4, %s378
      // Predicated region
      $region37: #{_lambda_.18} parent=35 // pred_check
        %p380 = pneg %p152
      $region38: #{_lambda_.18} parent=35 // pred_check_branch
        %382 = sbr.rel (%p380) target = $region40
      $region39: #{_lambda_.18} parent=35 // pred_region
        _
      $region40: #{_lambda_.18} parent=35 // pred_fallthru
        _
    $region36: #{_lambda_.18} parent=5 // pred_fallthru
      _
    %p383 = scmp.le.s32.totalorder 2, %s10
    // Predicated region
    $region41: #{_lambda_.18} parent=5 // pred_check
      %p384 = pneg %p383
    $region42: #{_lambda_.18} parent=5 // pred_check_branch
      %386 = sbr.rel (%p384) target = $region44
    $region43: #{_lambda_.18} parent=5 // pred_region
      %s387 = ssub.s32 %s10, 2
      // Predicated region
      $region45: #{_lambda_.18} parent=43 // pred_check
        %p388 = pneg %p158
      $region46: #{_lambda_.18} parent=43 // pred_check_branch
        %390 = sbr.rel (%p388) target = $region48
      $region47: #{_lambda_.18} parent=43 // pred_region
        %p391 = scmp.lt.s32.totalorder %s21, 1
        %s392 = scalar_select %p391, %s21, 1
        %p393 = scmp.lt.s32.totalorder %s22, 3
        %s394 = scalar_select %p393, %s22, 3
        %s395 = smul.addr %s392, 4
        %s396 = sadd.s32 %s394, %s395
        %s397 = smul.addr %s396, 8
        %s398 = scalar_lea.vmem %s4, %s397
      $region48: #{_lambda_.18} parent=43 // pred_fallthru
        _
    $region44: #{_lambda_.18} parent=5 // pred_fallthru
      _
  $region6: #{_lambda_.18} parent=0 // loop_footer
    %s14 = sadd.s32 1, %s10
  $region7: #{_lambda_.18} parent=0 // loop_footer_branch
    %9 = sbr.rel target = $region3
  $region8: #{_lambda_.18} parent=0 // loop_exit
    _

// kernel: _lambda_.19
$region0: #{_lambda_.19}
  #allocation0 [shape = 'u32[]', space=smem, size = 0x4, offset = 0x4, fixed_abs, tag = 'smem constant byte address 0x4 - core index']
  #allocation1 [shape = 'u32[72,128]{1,0:T(1,128)}', space=vmem, size = 0x9000, scoped, tag = 'internal scratch']
  %s0 = inlined_call_operand.vmem [shape: f32[16,32], index: 0, kind: input, shape index: {}]
  %s1 = inlined_call_operand.vmem [shape: f32[16,32], index: 1, kind: input, shape index: {}]
  %s2 = inlined_call_operand.vmem [shape: f32[32,32], index: 2, kind: input, shape index: {}]
  %s3 = inlined_call_operand.vmem [shape: f32[32,8], index: 3, kind: input, shape index: {}]
  %s4 = inlined_call_operand.vmem [shape: f32[8,32], index: 4, kind: input, shape index: {}]
  %s5 = inlined_call_operand.vmem [shape: f32[16,32], index: 5, kind: output, shape index: {}]
  %s6 = sld [smem:[#allocation0]]
  $region30: #{_lambda_.19} parent=0
    _
  %s8 = ssub.s32 1, %s6
  %s9 = scalar_select 0, %s8, %s6
  // Predicated region
  $region2: #{_lambda_.19} parent=0 // pred_check
    _
  $region3: #{_lambda_.19} parent=0 // pred_check_branch
    %11 = sbr.rel (0) target = $region5
  $region4: #{_lambda_.19} parent=0 // pred_region
    _
  $region5: #{_lambda_.19} parent=0 // pred_fallthru
    _
  // Predicated region
  $region6: #{_lambda_.19} parent=0 // pred_check
    _
  $region7: #{_lambda_.19} parent=0 // pred_check_branch
    %13 = sbr.rel (0) target = $region9
  $region8: #{_lambda_.19} parent=0 // pred_region
    _
  $region9: #{_lambda_.19} parent=0 // pred_fallthru
    _
  // Predicated region
  $region10: #{_lambda_.19} parent=0 // pred_check
    _
  $region11: #{_lambda_.19} parent=0 // pred_check_branch
    %15 = sbr.rel (0) target = $region13
  $region12: #{_lambda_.19} parent=0 // pred_region
    _
  $region13: #{_lambda_.19} parent=0 // pred_fallthru
    _
  // Predicated region
  $region14: #{_lambda_.19} parent=0 // pred_check
    _
  $region15: #{_lambda_.19} parent=0 // pred_check_branch
    %17 = sbr.rel (0) target = $region17
  $region16: #{_lambda_.19} parent=0 // pred_region
    _
  $region17: #{_lambda_.19} parent=0 // pred_fallthru
    _
  // Predicated region
  $region18: #{_lambda_.19} parent=0 // pred_check
    _
  $region19: #{_lambda_.19} parent=0 // pred_check_branch
    %19 = sbr.rel (0) target = $region21
  $region20: #{_lambda_.19} parent=0 // pred_region
    _
  $region21: #{_lambda_.19} parent=0 // pred_fallthru
    _
  %v20 = vld [vmem:[%s0] sm:$0xff]
  %v21 = vld [vmem:[%s0 + $0x8] sm:$0xff]
  %v22 = vld [vmem:[%s2] sm:$0xff]
  %v23 = vld [vmem:[%s2 + $0x8] sm:$0xff]
  %v24 = vld [vmem:[%s2 + $0x10] sm:$0xff]
  %v25 = vld [vmem:[%s2 + $0x18] sm:$0xff]
  %v26 = vld [vmem:[%s1] sm:$0xff]
  %v27 = vld [vmem:[%s1 + $0x8] sm:$0xff]
  %v28 = vld [vmem:[%s3] sm:$0xff]
  %v29 = vld [vmem:[%s3 + $0x8] sm:$0xff]
  %v30 = vld [vmem:[%s3 + $0x10] sm:$0xff]
  %v31 = vld [vmem:[%s3 + $0x18] sm:$0xff]
  %vm32 = vcmask 261120
  %v34 = vsel %vm32, %v26, 0
  %v37 = vsel %vm32, %v27, 0
  %39 = vmatpush.msra.mxu0 0.0
  %40 = vmatpush.msra.mxu0 0.0
  %41 = vmatpush.msra.mxu0 0.0
  %42 = vmatpush.msra.mxu0 0.0
  %43 = vmatpush.msra.mxu0 0.0
  %44 = vmatpush.msra.mxu0 0.0
  %45 = vmatpush.msra.mxu0 0.0
  %46 = vmatpush.msra.mxu0 0.0
  %47 = vmatpush.msra.mxu0 0.0
  %48 = vmatpush.msra.mxu0 0.0
  %49 = vmatpush.msra.mxu0 0.0
  %50 = vmatpush.msra.mxu0 0.0
  %51 = vmatpush.msra.mxu0 %v31
  %52 = vmatpush.msra.mxu0 %v30
  %53 = vmatpush.msra.mxu0 %v29
  %54 = vmatpush.msra.mxu0 %v28
  %55 = vmatmul.f32.gmra.mxu0 %v34
  %v56 = vpop.f32.mrf.mxu0
  %v57 = vadd.f32 0.0, %v56
  %58 = vmatmul.f32.gmra.mxu0 %v37
  %v59 = vpop.f32.mrf.mxu0
  %v60 = vadd.f32 0.0, %v59
  %61 = vdwg.mxu0
  %v62 = vld [vmem:[%s4] sm:$0xff]
  %vm63 = vcmask 64512
  %v65 = vsel %vm63, %v57, 0
  %v68 = vsel %vm63, %v60, 0
  %70 = vmatpush.msra.mxu0 0.0
  %71 = vmatpush.msra.mxu0 0.0
  %72 = vmatpush.msra.mxu0 0.0
  %73 = vmatpush.msra.mxu0 0.0
  %74 = vmatpush.msra.mxu0 0.0
  %75 = vmatpush.msra.mxu0 0.0
  %76 = vmatpush.msra.mxu0 0.0
  %77 = vmatpush.msra.mxu0 0.0
  %78 = vmatpush.msra.mxu0 0.0
  %79 = vmatpush.msra.mxu0 0.0
  %80 = vmatpush.msra.mxu0 0.0
  %81 = vmatpush.msra.mxu0 0.0
  %82 = vmatpush.msra.mxu0 0.0
  %83 = vmatpush.msra.mxu0 0.0
  %84 = vmatpush.msra.mxu0 0.0
  %85 = vmatpush.msra.mxu0 %v62
  %86 = vmatmul.f32.gmra.mxu0 %v65
  %v87 = vpop.f32.mrf.mxu0
  %v88 = vadd.f32 0.0, %v87
  %89 = vmatmul.f32.gmra.mxu0 %v68
  %v90 = vpop.f32.mrf.mxu0
  %v91 = vadd.f32 0.0, %v90
  %92 = vdwg.mxu0
  %v93 = vmul.f32 %v88, 2.0
  %v94 = vmul.f32 %v91, 2.0
  %v96 = vsel %vm32, %v20, 0
  %v99 = vsel %vm32, %v21, 0
  %101 = vmatpush.msra.mxu0 0.0
  %102 = vmatpush.msra.mxu0 0.0
  %103 = vmatpush.msra.mxu0 0.0
  %104 = vmatpush.msra.mxu0 0.0
  %105 = vmatpush.msra.mxu0 0.0
  %106 = vmatpush.msra.mxu0 0.0
  %107 = vmatpush.msra.mxu0 0.0
  %108 = vmatpush.msra.mxu0 0.0
  %109 = vmatpush.msra.mxu0 0.0
  %110 = vmatpush.msra.mxu0 0.0
  %111 = vmatpush.msra.mxu0 0.0
  %112 = vmatpush.msra.mxu0 0.0
  %113 = vmatpush.msra.mxu0 %v25
  %114 = vmatpush.msra.mxu0 %v24
  %115 = vmatpush.msra.mxu0 %v23
  %116 = vmatpush.msra.mxu0 %v22
  %117 = vmatmul.f32.gmra.mxu0 %v96
  %v118 = vpop.f32.mrf.mxu0
  %v119 = vadd.f32 %v93, %v118
  %120 = vmatmul.f32.gmra.mxu0 %v99
  %v121 = vpop.f32.mrf.mxu0
  %v122 = vadd.f32 %v94, %v121
  %123 = vdwg.mxu0
  %124 = vst.msk [vmem:[%s5] sm:$0xff] %vm32, %v119
  %125 = vst.msk [vmem:[%s5 + $0x8] sm:$0xff] %vm32, %v122
  // Predicated region
  $region22: #{_lambda_.19} parent=0 // pred_check
    _
  $region23: #{_lambda_.19} parent=0 // pred_check_branch
    %127 = sbr.rel (0) target = $region25
  $region24: #{_lambda_.19} parent=0 // pred_region
    _
  $region25: #{_lambda_.19} parent=0 // pred_fallthru
    _
  // Predicated region
  $region26: #{_lambda_.19} parent=0 // pred_check
    _
  $region27: #{_lambda_.19} parent=0 // pred_check_branch
    %129 = sbr.rel (0) target = $region29
  $region28: #{_lambda_.19} parent=0 // pred_region
    _
  $region29: #{_lambda_.19} parent=0 // pred_fallthru
    _

// kernel: _lambda_.21
$region0: #{_lambda_.21}
  #allocation0 [shape = 'u32[]', space=smem, size = 0x4, offset = 0x4, fixed_abs, tag = 'smem constant byte address 0x4 - core index']
  #allocation1 [shape = 'u32[72,128]{1,0:T(1,128)}', space=vmem, size = 0x9000, scoped, tag = 'internal scratch']
  %s0 = inlined_call_operand.vmem [shape: f32[16,32], index: 0, kind: input, shape index: {}]
  %s1 = inlined_call_operand.vmem [shape: f32[32,96], index: 1, kind: input, shape index: {}]
  %s2 = inlined_call_operand.vmem [shape: f32[32,8], index: 2, kind: input, shape index: {}]
  %s3 = inlined_call_operand.vmem [shape: f32[8,96], index: 3, kind: input, shape index: {}]
  %s4 = inlined_call_operand.vmem [shape: f32[32,96], index: 4, kind: input, shape index: {}]
  %s5 = inlined_call_operand.vmem [shape: f32[32,8], index: 5, kind: input, shape index: {}]
  %s6 = inlined_call_operand.vmem [shape: f32[8,96], index: 6, kind: input, shape index: {}]
  %s7 = inlined_call_operand.vmem [shape: f32[16,96], index: 7, kind: output, shape index: {}]
  %s8 = sld [smem:[#allocation0]]
  $region38: #{_lambda_.21} parent=0
    _
  %s10 = ssub.s32 1, %s8
  %s11 = scalar_select 0, %s10, %s8
  // Predicated region
  $region2: #{_lambda_.21} parent=0 // pred_check
    _
  $region3: #{_lambda_.21} parent=0 // pred_check_branch
    %13 = sbr.rel (0) target = $region5
  $region4: #{_lambda_.21} parent=0 // pred_region
    _
  $region5: #{_lambda_.21} parent=0 // pred_fallthru
    _
  // Predicated region
  $region6: #{_lambda_.21} parent=0 // pred_check
    _
  $region7: #{_lambda_.21} parent=0 // pred_check_branch
    %15 = sbr.rel (0) target = $region9
  $region8: #{_lambda_.21} parent=0 // pred_region
    _
  $region9: #{_lambda_.21} parent=0 // pred_fallthru
    _
  // Predicated region
  $region10: #{_lambda_.21} parent=0 // pred_check
    _
  $region11: #{_lambda_.21} parent=0 // pred_check_branch
    %17 = sbr.rel (0) target = $region13
  $region12: #{_lambda_.21} parent=0 // pred_region
    _
  $region13: #{_lambda_.21} parent=0 // pred_fallthru
    _
  // Predicated region
  $region14: #{_lambda_.21} parent=0 // pred_check
    _
  $region15: #{_lambda_.21} parent=0 // pred_check_branch
    %19 = sbr.rel (0) target = $region17
  $region16: #{_lambda_.21} parent=0 // pred_region
    _
  $region17: #{_lambda_.21} parent=0 // pred_fallthru
    _
  // Predicated region
  $region18: #{_lambda_.21} parent=0 // pred_check
    _
  $region19: #{_lambda_.21} parent=0 // pred_check_branch
    %21 = sbr.rel (0) target = $region21
  $region20: #{_lambda_.21} parent=0 // pred_region
    _
  $region21: #{_lambda_.21} parent=0 // pred_fallthru
    _
  // Predicated region
  $region22: #{_lambda_.21} parent=0 // pred_check
    _
  $region23: #{_lambda_.21} parent=0 // pred_check_branch
    %23 = sbr.rel (0) target = $region25
  $region24: #{_lambda_.21} parent=0 // pred_region
    _
  $region25: #{_lambda_.21} parent=0 // pred_fallthru
    _
  // Predicated region
  $region26: #{_lambda_.21} parent=0 // pred_check
    _
  $region27: #{_lambda_.21} parent=0 // pred_check_branch
    %25 = sbr.rel (0) target = $region29
  $region28: #{_lambda_.21} parent=0 // pred_region
    _
  $region29: #{_lambda_.21} parent=0 // pred_fallthru
    _
  %v26 = vld [vmem:[%s0] sm:$0xff]
  %v27 = vld [vmem:[%s0 + $0x8] sm:$0xff]
  %v28 = vld [vmem:[%s1] sm:$0xff]
  %v29 = vld [vmem:[%s1 + $0x8] sm:$0xff]
  %v30 = vld [vmem:[%s1 + $0x10] sm:$0xff]
  %v31 = vld [vmem:[%s1 + $0x18] sm:$0xff]
  %v32 = vld [vmem:[%s2] sm:$0xff]
  %v33 = vld [vmem:[%s2 + $0x8] sm:$0xff]
  %v34 = vld [vmem:[%s2 + $0x10] sm:$0xff]
  %v35 = vld [vmem:[%s2 + $0x18] sm:$0xff]
  %vm36 = vcmask 261120
  %v38 = vsel %vm36, %v26, 0
  %v41 = vsel %vm36, %v27, 0
  %43 = vmatpush.msra.mxu0 0.0
  %44 = vmatpush.msra.mxu0 0.0
  %45 = vmatpush.msra.mxu0 0.0
  %46 = vmatpush.msra.mxu0 0.0
  %47 = vmatpush.msra.mxu0 0.0
  %48 = vmatpush.msra.mxu0 0.0
  %49 = vmatpush.msra.mxu0 0.0
  %50 = vmatpush.msra.mxu0 0.0
  %51 = vmatpush.msra.mxu0 0.0
  %52 = vmatpush.msra.mxu0 0.0
  %53 = vmatpush.msra.mxu0 0.0
  %54 = vmatpush.msra.mxu0 0.0
  %55 = vmatpush.msra.mxu0 %v35
  %56 = vmatpush.msra.mxu0 %v34
  %57 = vmatpush.msra.mxu0 %v33
  %58 = vmatpush.msra.mxu0 %v32
  %59 = vmatmul.f32.gmra.mxu0 %v38
  %v60 = vpop.f32.mrf.mxu0
  %v61 = vadd.f32 0.0, %v60
  %62 = vmatmul.f32.gmra.mxu0 %v41
  %v63 = vpop.f32.mrf.mxu0
  %v64 = vadd.f32 0.0, %v63
  %65 = vdwg.mxu0
  %v66 = vld [vmem:[%s3] sm:$0xff]
  %vm67 = vcmask 64512
  %v69 = vsel %vm67, %v61, 0
  %v72 = vsel %vm67, %v64, 0
  %74 = vmatpush.msra.mxu0 0.0
  %75 = vmatpush.msra.mxu0 0.0
  %76 = vmatpush.msra.mxu0 0.0
  %77 = vmatpush.msra.mxu0 0.0
  %78 = vmatpush.msra.mxu0 0.0
  %79 = vmatpush.msra.mxu0 0.0
  %80 = vmatpush.msra.mxu0 0.0
  %81 = vmatpush.msra.mxu0 0.0
  %82 = vmatpush.msra.mxu0 0.0
  %83 = vmatpush.msra.mxu0 0.0
  %84 = vmatpush.msra.mxu0 0.0
  %85 = vmatpush.msra.mxu0 0.0
  %86 = vmatpush.msra.mxu0 0.0
  %87 = vmatpush.msra.mxu0 0.0
  %88 = vmatpush.msra.mxu0 0.0
  %89 = vmatpush.msra.mxu0 %v66
  %90 = vmatmul.f32.gmra.mxu0 %v69
  %v91 = vpop.f32.mrf.mxu0
  %v92 = vadd.f32 0.0, %v91
  %93 = vmatmul.f32.gmra.mxu0 %v72
  %v94 = vpop.f32.mrf.mxu0
  %v95 = vadd.f32 0.0, %v94
  %96 = vdwg.mxu0
  %v97 = vmul.f32 %v92, 2.0
  %v98 = vmul.f32 %v95, 2.0
  %99 = vmatpush.msra.mxu0 0.0
  %100 = vmatpush.msra.mxu0 0.0
  %101 = vmatpush.msra.mxu0 0.0
  %102 = vmatpush.msra.mxu0 0.0
  %103 = vmatpush.msra.mxu0 0.0
  %104 = vmatpush.msra.mxu0 0.0
  %105 = vmatpush.msra.mxu0 0.0
  %106 = vmatpush.msra.mxu0 0.0
  %107 = vmatpush.msra.mxu0 0.0
  %108 = vmatpush.msra.mxu0 0.0
  %109 = vmatpush.msra.mxu0 0.0
  %110 = vmatpush.msra.mxu0 0.0
  %111 = vmatpush.msra.mxu0 %v31
  %112 = vmatpush.msra.mxu0 %v30
  %113 = vmatpush.msra.mxu0 %v29
  %114 = vmatpush.msra.mxu0 %v28
  %115 = vmatmul.f32.gmra.mxu0 %v38
  %v116 = vpop.f32.mrf.mxu0
  %v117 = vadd.f32 %v97, %v116
  %118 = vmatmul.f32.gmra.mxu0 %v41
  %v119 = vpop.f32.mrf.mxu0
  %v120 = vadd.f32 %v98, %v119
  %121 = vdwg.mxu0
  %v122 = vld [vmem:[%s4] sm:$0xff]
  %v123 = vld [vmem:[%s4 + $0x8] sm:$0xff]
  %v124 = vld [vmem:[%s4 + $0x10] sm:$0xff]
  %v125 = vld [vmem:[%s4 + $0x18] sm:$0xff]
  %v126 = vld [vmem:[%s5] sm:$0xff]
  %v127 = vld [vmem:[%s5 + $0x8] sm:$0xff]
  %v128 = vld [vmem:[%s5 + $0x10] sm:$0xff]
  %v129 = vld [vmem:[%s5 + $0x18] sm:$0xff]
  %130 = vmatpush.msra.mxu0 0.0
  %131 = vmatpush.msra.mxu0 0.0
  %132 = vmatpush.msra.mxu0 0.0
  %133 = vmatpush.msra.mxu0 0.0
  %134 = vmatpush.msra.mxu0 0.0
  %135 = vmatpush.msra.mxu0 0.0
  %136 = vmatpush.msra.mxu0 0.0
  %137 = vmatpush.msra.mxu0 0.0
  %138 = vmatpush.msra.mxu0 0.0
  %139 = vmatpush.msra.mxu0 0.0
  %140 = vmatpush.msra.mxu0 0.0
  %141 = vmatpush.msra.mxu0 0.0
  %142 = vmatpush.msra.mxu0 %v129
  %143 = vmatpush.msra.mxu0 %v128
  %144 = vmatpush.msra.mxu0 %v127
  %145 = vmatpush.msra.mxu0 %v126
  %146 = vmatmul.f32.gmra.mxu0 %v38
  %v147 = vpop.f32.mrf.mxu0
  %v148 = vadd.f32 0.0, %v147
  %149 = vmatmul.f32.gmra.mxu0 %v41
  %v150 = vpop.f32.mrf.mxu0
  %v151 = vadd.f32 0.0, %v150
  %152 = vdwg.mxu0
  %v153 = vld [vmem:[%s6] sm:$0xff]
  %v155 = vsel %vm67, %v148, 0
  %v158 = vsel %vm67, %v151, 0
  %160 = vmatpush.msra.mxu0 0.0
  %161 = vmatpush.msra.mxu0 0.0
  %162 = vmatpush.msra.mxu0 0.0
  %163 = vmatpush.msra.mxu0 0.0
  %164 = vmatpush.msra.mxu0 0.0
  %165 = vmatpush.msra.mxu0 0.0
  %166 = vmatpush.msra.mxu0 0.0
  %167 = vmatpush.msra.mxu0 0.0
  %168 = vmatpush.msra.mxu0 0.0
  %169 = vmatpush.msra.mxu0 0.0
  %170 = vmatpush.msra.mxu0 0.0
  %171 = vmatpush.msra.mxu0 0.0
  %172 = vmatpush.msra.mxu0 0.0
  %173 = vmatpush.msra.mxu0 0.0
  %174 = vmatpush.msra.mxu0 0.0
  %175 = vmatpush.msra.mxu0 %v153
  %176 = vmatmul.f32.gmra.mxu0 %v155
  %v177 = vpop.f32.mrf.mxu0
  %v178 = vadd.f32 0.0, %v177
  %179 = vmatmul.f32.gmra.mxu0 %v158
  %v180 = vpop.f32.mrf.mxu0
  %v181 = vadd.f32 0.0, %v180
  %182 = vdwg.mxu0
  %v183 = vmul.f32 %v178, 2.0
  %v184 = vmul.f32 %v181, 2.0
  %185 = vmatpush.msra.mxu0 0.0
  %186 = vmatpush.msra.mxu0 0.0
  %187 = vmatpush.msra.mxu0 0.0
  %188 = vmatpush.msra.mxu0 0.0
  %189 = vmatpush.msra.mxu0 0.0
  %190 = vmatpush.msra.mxu0 0.0
  %191 = vmatpush.msra.mxu0 0.0
  %192 = vmatpush.msra.mxu0 0.0
  %193 = vmatpush.msra.mxu0 0.0
  %194 = vmatpush.msra.mxu0 0.0
  %195 = vmatpush.msra.mxu0 0.0
  %196 = vmatpush.msra.mxu0 0.0
  %197 = vmatpush.msra.mxu0 %v125
  %198 = vmatpush.msra.mxu0 %v124
  %199 = vmatpush.msra.mxu0 %v123
  %200 = vmatpush.msra.mxu0 %v122
  %201 = vmatmul.f32.gmra.mxu0 %v38
  %v202 = vpop.f32.mrf.mxu0
  %v203 = vadd.f32 %v183, %v202
  %204 = vmatmul.f32.gmra.mxu0 %v41
  %v205 = vpop.f32.mrf.mxu0
  %v206 = vadd.f32 %v184, %v205
  %207 = vdwg.mxu0
  %v208 = vxor.u32 %v117, 2147483648
  %v209 = vxor.u32 %v120, 2147483648
  %v210 = vmul.f32 %v208, 1.442695
  %v211 = vpow.pop %v210
  %v212 = vmul.f32 %v209, 1.442695
  %v213 = vpow.pop %v212
  %v214 = vadd.f32 %v211, 1.0
  %v215 = vadd.f32 %v213, 1.0
  %v216 = vrcp.pop %v214
  %v217 = vmul.f32 %v214, %v216
  %v218 = vsub.f32 1.0, %v217
  %v219 = vmul.f32 %v216, %v218
  %v220 = vadd.f32 %v216, %v219
  %vm221 = vweird.f32 %v214
  %vm222 = vweird.f32 %v216
  %vm223 = vmor %vm221, %vm222
  %v224 = vsel %vm223, %v216, %v220
  %v225 = vand.u32 2147483647, %v214
  %vm226 = vcmp.eq.f32.partialorder %v225, 8.507059e+37
  %v227 = vand.u32 %v214, 2147483648
  %v228 = vor.u32 1.1754944e-38, %v227
  %v229 = vsel %vm226, %v228, %v224
  %v230 = vmul.f32 1.0, %v229
  %v231 = vrcp.pop %v215
  %v232 = vmul.f32 %v215, %v231
  %v233 = vsub.f32 1.0, %v232
  %v234 = vmul.f32 %v231, %v233
  %v235 = vadd.f32 %v231, %v234
  %vm236 = vweird.f32 %v215
  %vm237 = vweird.f32 %v231
  %vm238 = vmor %vm236, %vm237
  %v239 = vsel %vm238, %v231, %v235
  %v240 = vand.u32 2147483647, %v215
  %vm241 = vcmp.eq.f32.partialorder %v240, 8.507059e+37
  %v242 = vand.u32 %v215, 2147483648
  %v243 = vor.u32 1.1754944e-38, %v242
  %v244 = vsel %vm241, %v243, %v239
  %v245 = vmul.f32 1.0, %v244
  %v246 = vmul.f32 %v117, %v230
  %v247 = vmul.f32 %v120, %v245
  %v248 = vmul.f32 %v246, %v203
  %v249 = vmul.f32 %v247, %v206
  %vm250 = vcmask 785408
  %251 = vst.msk [vmem:[%s7] sm:$0xff] %vm250, %v248
  %252 = vst.msk [vmem:[%s7 + $0x8] sm:$0xff] %vm250, %v249
  // Predicated region
  $region30: #{_lambda_.21} parent=0 // pred_check
    _
  $region31: #{_lambda_.21} parent=0 // pred_check_branch
    %254 = sbr.rel (0) target = $region33
  $region32: #{_lambda_.21} parent=0 // pred_region
    _
  $region33: #{_lambda_.21} parent=0 // pred_fallthru
    _
  // Predicated region
  $region34: #{_lambda_.21} parent=0 // pred_check
    _
  $region35: #{_lambda_.21} parent=0 // pred_check_branch
    %256 = sbr.rel (0) target = $region37
  $region36: #{_lambda_.21} parent=0 // pred_region
    _
  $region37: #{_lambda_.21} parent=0 // pred_fallthru
    _

// kernel: _lambda_.22
$region0: #{_lambda_.22}
  #allocation0 [shape = 'u32[]', space=smem, size = 0x4, offset = 0x4, fixed_abs, tag = 'smem constant byte address 0x4 - core index']
  #allocation1 [shape = 'u32[72,128]{1,0:T(1,128)}', space=vmem, size = 0x9000, scoped, tag = 'internal scratch']
  %s0 = inlined_call_operand.vmem [shape: f32[16,96], index: 0, kind: input, shape index: {}, may-alias: {0,1}]
  %s1 = inlined_call_operand.vmem [shape: f32[16,96], index: 1, kind: input, shape index: {}, may-alias: {0,1}]
  %s2 = inlined_call_operand.vmem [shape: f32[96,32], index: 2, kind: input, shape index: {}]
  %s3 = inlined_call_operand.vmem [shape: f32[96,8], index: 3, kind: input, shape index: {}]
  %s4 = inlined_call_operand.vmem [shape: f32[8,32], index: 4, kind: input, shape index: {}]
  %s5 = inlined_call_operand.vmem [shape: f32[16,32], index: 5, kind: output, shape index: {}]
  %s6 = sld [smem:[#allocation0]]
  $region30: #{_lambda_.22} parent=0
    _
  %s8 = ssub.s32 1, %s6
  %s9 = scalar_select 0, %s8, %s6
  // Predicated region
  $region2: #{_lambda_.22} parent=0 // pred_check
    _
  $region3: #{_lambda_.22} parent=0 // pred_check_branch
    %11 = sbr.rel (0) target = $region5
  $region4: #{_lambda_.22} parent=0 // pred_region
    _
  $region5: #{_lambda_.22} parent=0 // pred_fallthru
    _
  // Predicated region
  $region6: #{_lambda_.22} parent=0 // pred_check
    _
  $region7: #{_lambda_.22} parent=0 // pred_check_branch
    %13 = sbr.rel (0) target = $region9
  $region8: #{_lambda_.22} parent=0 // pred_region
    _
  $region9: #{_lambda_.22} parent=0 // pred_fallthru
    _
  // Predicated region
  $region10: #{_lambda_.22} parent=0 // pred_check
    _
  $region11: #{_lambda_.22} parent=0 // pred_check_branch
    %15 = sbr.rel (0) target = $region13
  $region12: #{_lambda_.22} parent=0 // pred_region
    _
  $region13: #{_lambda_.22} parent=0 // pred_fallthru
    _
  // Predicated region
  $region14: #{_lambda_.22} parent=0 // pred_check
    _
  $region15: #{_lambda_.22} parent=0 // pred_check_branch
    %17 = sbr.rel (0) target = $region17
  $region16: #{_lambda_.22} parent=0 // pred_region
    _
  $region17: #{_lambda_.22} parent=0 // pred_fallthru
    _
  // Predicated region
  $region18: #{_lambda_.22} parent=0 // pred_check
    _
  $region19: #{_lambda_.22} parent=0 // pred_check_branch
    %19 = sbr.rel (0) target = $region21
  $region20: #{_lambda_.22} parent=0 // pred_region
    _
  $region21: #{_lambda_.22} parent=0 // pred_fallthru
    _
  %v20 = vld [vmem:[%s0] sm:$0xff]
  %v21 = vld [vmem:[%s0 + $0x8] sm:$0xff]
  %v22 = vld [vmem:[%s2] sm:$0xff]
  %v23 = vld [vmem:[%s2 + $0x8] sm:$0xff]
  %v24 = vld [vmem:[%s2 + $0x10] sm:$0xff]
  %v25 = vld [vmem:[%s2 + $0x18] sm:$0xff]
  %v26 = vld [vmem:[%s2 + $0x20] sm:$0xff]
  %v27 = vld [vmem:[%s2 + $0x28] sm:$0xff]
  %v28 = vld [vmem:[%s2 + $0x30] sm:$0xff]
  %v29 = vld [vmem:[%s2 + $0x38] sm:$0xff]
  %v30 = vld [vmem:[%s2 + $0x40] sm:$0xff]
  %v31 = vld [vmem:[%s2 + $0x48] sm:$0xff]
  %v32 = vld [vmem:[%s2 + $0x50] sm:$0xff]
  %v33 = vld [vmem:[%s2 + $0x58] sm:$0xff]
  %v34 = vld [vmem:[%s1] sm:$0xff]
  %v35 = vld [vmem:[%s1 + $0x8] sm:$0xff]
  %v36 = vld [vmem:[%s3] sm:$0xff]
  %v37 = vld [vmem:[%s3 + $0x8] sm:$0xff]
  %v38 = vld [vmem:[%s3 + $0x10] sm:$0xff]
  %v39 = vld [vmem:[%s3 + $0x18] sm:$0xff]
  %v40 = vld [vmem:[%s3 + $0x20] sm:$0xff]
  %v41 = vld [vmem:[%s3 + $0x28] sm:$0xff]
  %v42 = vld [vmem:[%s3 + $0x30] sm:$0xff]
  %v43 = vld [vmem:[%s3 + $0x38] sm:$0xff]
  %v44 = vld [vmem:[%s3 + $0x40] sm:$0xff]
  %v45 = vld [vmem:[%s3 + $0x48] sm:$0xff]
  %v46 = vld [vmem:[%s3 + $0x50] sm:$0xff]
  %v47 = vld [vmem:[%s3 + $0x58] sm:$0xff]
  %vm48 = vcmask 785408
  %v50 = vsel %vm48, %v34, 0
  %v53 = vsel %vm48, %v35, 0
  %55 = vmatpush.msra.mxu0 0.0
  %56 = vmatpush.msra.mxu0 0.0
  %57 = vmatpush.msra.mxu0 0.0
  %58 = vmatpush.msra.mxu0 0.0
  %59 = vmatpush.msra.mxu0 %v47
  %60 = vmatpush.msra.mxu0 %v46
  %61 = vmatpush.msra.mxu0 %v45
  %62 = vmatpush.msra.mxu0 %v44
  %63 = vmatpush.msra.mxu0 %v43
  %64 = vmatpush.msra.mxu0 %v42
  %65 = vmatpush.msra.mxu0 %v41
  %66 = vmatpush.msra.mxu0 %v40
  %67 = vmatpush.msra.mxu0 %v39
  %68 = vmatpush.msra.mxu0 %v38
  %69 = vmatpush.msra.mxu0 %v37
  %70 = vmatpush.msra.mxu0 %v36
  %71 = vmatmul.f32.gmra.mxu0 %v50
  %v72 = vpop.f32.mrf.mxu0
  %v73 = vadd.f32 0.0, %v72
  %74 = vmatmul.f32.gmra.mxu0 %v53
  %v75 = vpop.f32.mrf.mxu0
  %v76 = vadd.f32 0.0, %v75
  %77 = vdwg.mxu0
  %v78 = vld [vmem:[%s4] sm:$0xff]
  %vm79 = vcmask 64512
  %v81 = vsel %vm79, %v73, 0
  %v84 = vsel %vm79, %v76, 0
  %86 = vmatpush.msra.mxu0 0.0
  %87 = vmatpush.msra.mxu0 0.0
  %88 = vmatpush.msra.mxu0 0.0
  %89 = vmatpush.msra.mxu0 0.0
  %90 = vmatpush.msra.mxu0 0.0
  %91 = vmatpush.msra.mxu0 0.0
  %92 = vmatpush.msra.mxu0 0.0
  %93 = vmatpush.msra.mxu0 0.0
  %94 = vmatpush.msra.mxu0 0.0
  %95 = vmatpush.msra.mxu0 0.0
  %96 = vmatpush.msra.mxu0 0.0
  %97 = vmatpush.msra.mxu0 0.0
  %98 = vmatpush.msra.mxu0 0.0
  %99 = vmatpush.msra.mxu0 0.0
  %100 = vmatpush.msra.mxu0 0.0
  %101 = vmatpush.msra.mxu0 %v78
  %102 = vmatmul.f32.gmra.mxu0 %v81
  %v103 = vpop.f32.mrf.mxu0
  %v104 = vadd.f32 0.0, %v103
  %105 = vmatmul.f32.gmra.mxu0 %v84
  %v106 = vpop.f32.mrf.mxu0
  %v107 = vadd.f32 0.0, %v106
  %108 = vdwg.mxu0
  %v109 = vmul.f32 %v104, 2.0
  %v110 = vmul.f32 %v107, 2.0
  %v112 = vsel %vm48, %v20, 0
  %v115 = vsel %vm48, %v21, 0
  %117 = vmatpush.msra.mxu0 0.0
  %118 = vmatpush.msra.mxu0 0.0
  %119 = vmatpush.msra.mxu0 0.0
  %120 = vmatpush.msra.mxu0 0.0
  %121 = vmatpush.msra.mxu0 %v33
  %122 = vmatpush.msra.mxu0 %v32
  %123 = vmatpush.msra.mxu0 %v31
  %124 = vmatpush.msra.mxu0 %v30
  %125 = vmatpush.msra.mxu0 %v29
  %126 = vmatpush.msra.mxu0 %v28
  %127 = vmatpush.msra.mxu0 %v27
  %128 = vmatpush.msra.mxu0 %v26
  %129 = vmatpush.msra.mxu0 %v25
  %130 = vmatpush.msra.mxu0 %v24
  %131 = vmatpush.msra.mxu0 %v23
  %132 = vmatpush.msra.mxu0 %v22
  %133 = vmatmul.f32.gmra.mxu0 %v112
  %v134 = vpop.f32.mrf.mxu0
  %v135 = vadd.f32 %v109, %v134
  %136 = vmatmul.f32.gmra.mxu0 %v115
  %v137 = vpop.f32.mrf.mxu0
  %v138 = vadd.f32 %v110, %v137
  %139 = vdwg.mxu0
  %vm140 = vcmask 261120
  %141 = vst.msk [vmem:[%s5] sm:$0xff] %vm140, %v135
  %142 = vst.msk [vmem:[%s5 + $0x8] sm:$0xff] %vm140, %v138
  // Predicated region
  $region22: #{_lambda_.22} parent=0 // pred_check
    _
  $region23: #{_lambda_.22} parent=0 // pred_check_branch
    %144 = sbr.rel (0) target = $region25
  $region24: #{_lambda_.22} parent=0 // pred_region
    _
  $region25: #{_lambda_.22} parent=0 // pred_fallthru
    _
  // Predicated region
  $region26: #{_lambda_.22} parent=0 // pred_check
    _
  $region27: #{_lambda_.22} parent=0 // pred_check_branch
    %146 = sbr.rel (0) target = $region29
  $region28: #{_lambda_.22} parent=0 // pred_region
    _
  $region29: #{_lambda_.22} parent=0 // pred_fallthru
    _

// kernel: _lambda_.31
$region0: #{_lambda_.31}
  #allocation0 [shape = 'u32[]', space=smem, size = 0x4, offset = 0x4, fixed_abs, tag = 'smem constant byte address 0x4 - core index']
  #allocation1 [shape = 'u32[72,128]{1,0:T(1,128)}', space=vmem, size = 0x9000, scoped, tag = 'internal scratch']
  %s0 = inlined_call_operand.vmem [shape: f32[16,32], index: 0, kind: input, shape index: {}, may-alias: {0,1}]
  %s1 = inlined_call_operand.vmem [shape: f32[16,32], index: 1, kind: input, shape index: {}, may-alias: {0,1}]
  %s2 = inlined_call_operand.vmem [shape: f32[32,64], index: 2, kind: input, shape index: {}]
  %s3 = inlined_call_operand.vmem [shape: f32[32,8], index: 3, kind: input, shape index: {}]
  %s4 = inlined_call_operand.vmem [shape: f32[8,64], index: 4, kind: input, shape index: {}]
  %s5 = inlined_call_operand.hbm [shape: f32[16,64], index: 5, kind: output, shape index: {}]
  %s6 = sld [smem:[#allocation0]]
  $region30: #{_lambda_.31} parent=0
    _
  %s8 = ssub.s32 1, %s6
  %s9 = scalar_select 0, %s8, %s6
  $region1: #{_lambda_.31} parent=0
    #allocation2 [shape = 'u8[8192]{0}', space=vmem, size = 0x2000, scoped, tag = 'output window, operand 0, single buffered']
    #allocation3 [shape = 's32[1]{0}', space=sflag, size = 0x4, scoped, tag = 'scoped memory for _lambda_.31']
    %10 = vsyncpa [#allocation3], 0
    // Predicated region
    $region2: #{_lambda_.31} parent=1 // pred_check
      _
    $region3: #{_lambda_.31} parent=1 // pred_check_branch
      %12 = sbr.rel (0) target = $region5
    $region4: #{_lambda_.31} parent=1 // pred_region
      _
    $region5: #{_lambda_.31} parent=1 // pred_fallthru
      _
    // Predicated region
    $region6: #{_lambda_.31} parent=1 // pred_check
      _
    $region7: #{_lambda_.31} parent=1 // pred_check_branch
      %14 = sbr.rel (0) target = $region9
    $region8: #{_lambda_.31} parent=1 // pred_region
      _
    $region9: #{_lambda_.31} parent=1 // pred_fallthru
      _
    // Predicated region
    $region10: #{_lambda_.31} parent=1 // pred_check
      _
    $region11: #{_lambda_.31} parent=1 // pred_check_branch
      %16 = sbr.rel (0) target = $region13
    $region12: #{_lambda_.31} parent=1 // pred_region
      _
    $region13: #{_lambda_.31} parent=1 // pred_fallthru
      _
    // Predicated region
    $region14: #{_lambda_.31} parent=1 // pred_check
      _
    $region15: #{_lambda_.31} parent=1 // pred_check_branch
      %18 = sbr.rel (0) target = $region17
    $region16: #{_lambda_.31} parent=1 // pred_region
      _
    $region17: #{_lambda_.31} parent=1 // pred_fallthru
      _
    // Predicated region
    $region18: #{_lambda_.31} parent=1 // pred_check
      _
    $region19: #{_lambda_.31} parent=1 // pred_check_branch
      %20 = sbr.rel (0) target = $region21
    $region20: #{_lambda_.31} parent=1 // pred_region
      _
    $region21: #{_lambda_.31} parent=1 // pred_fallthru
      _
    %v21 = vld [vmem:[%s0] sm:$0xff]
    %v22 = vld [vmem:[%s0 + $0x8] sm:$0xff]
    %v23 = vld [vmem:[%s2] sm:$0xff]
    %v24 = vld [vmem:[%s2 + $0x8] sm:$0xff]
    %v25 = vld [vmem:[%s2 + $0x10] sm:$0xff]
    %v26 = vld [vmem:[%s2 + $0x18] sm:$0xff]
    %v27 = vld [vmem:[%s1] sm:$0xff]
    %v28 = vld [vmem:[%s1 + $0x8] sm:$0xff]
    %v29 = vld [vmem:[%s3] sm:$0xff]
    %v30 = vld [vmem:[%s3 + $0x8] sm:$0xff]
    %v31 = vld [vmem:[%s3 + $0x10] sm:$0xff]
    %v32 = vld [vmem:[%s3 + $0x18] sm:$0xff]
    %vm33 = vcmask 261120
    %v35 = vsel %vm33, %v27, 0
    %v38 = vsel %vm33, %v28, 0
    %40 = vmatpush.msra.mxu0 0.0
    %41 = vmatpush.msra.mxu0 0.0
    %42 = vmatpush.msra.mxu0 0.0
    %43 = vmatpush.msra.mxu0 0.0
    %44 = vmatpush.msra.mxu0 0.0
    %45 = vmatpush.msra.mxu0 0.0
    %46 = vmatpush.msra.mxu0 0.0
    %47 = vmatpush.msra.mxu0 0.0
    %48 = vmatpush.msra.mxu0 0.0
    %49 = vmatpush.msra.mxu0 0.0
    %50 = vmatpush.msra.mxu0 0.0
    %51 = vmatpush.msra.mxu0 0.0
    %52 = vmatpush.msra.mxu0 %v32
    %53 = vmatpush.msra.mxu0 %v31
    %54 = vmatpush.msra.mxu0 %v30
    %55 = vmatpush.msra.mxu0 %v29
    %56 = vmatmul.f32.gmra.mxu0 %v35
    %v57 = vpop.f32.mrf.mxu0
    %v58 = vadd.f32 0.0, %v57
    %59 = vmatmul.f32.gmra.mxu0 %v38
    %v60 = vpop.f32.mrf.mxu0
    %v61 = vadd.f32 0.0, %v60
    %62 = vdwg.mxu0
    %v63 = vld [vmem:[%s4] sm:$0xff]
    %vm64 = vcmask 64512
    %v66 = vsel %vm64, %v58, 0
    %v69 = vsel %vm64, %v61, 0
    %71 = vmatpush.msra.mxu0 0.0
    %72 = vmatpush.msra.mxu0 0.0
    %73 = vmatpush.msra.mxu0 0.0
    %74 = vmatpush.msra.mxu0 0.0
    %75 = vmatpush.msra.mxu0 0.0
    %76 = vmatpush.msra.mxu0 0.0
    %77 = vmatpush.msra.mxu0 0.0
    %78 = vmatpush.msra.mxu0 0.0
    %79 = vmatpush.msra.mxu0 0.0
    %80 = vmatpush.msra.mxu0 0.0
    %81 = vmatpush.msra.mxu0 0.0
    %82 = vmatpush.msra.mxu0 0.0
    %83 = vmatpush.msra.mxu0 0.0
    %84 = vmatpush.msra.mxu0 0.0
    %85 = vmatpush.msra.mxu0 0.0
    %86 = vmatpush.msra.mxu0 %v63
    %87 = vmatmul.f32.gmra.mxu0 %v66
    %v88 = vpop.f32.mrf.mxu0
    %v89 = vadd.f32 0.0, %v88
    %90 = vmatmul.f32.gmra.mxu0 %v69
    %v91 = vpop.f32.mrf.mxu0
    %v92 = vadd.f32 0.0, %v91
    %93 = vdwg.mxu0
    %v94 = vmul.f32 %v89, 2.0
    %v95 = vmul.f32 %v92, 2.0
    %v97 = vsel %vm33, %v21, 0
    %v100 = vsel %vm33, %v22, 0
    %102 = vmatpush.msra.mxu0 0.0
    %103 = vmatpush.msra.mxu0 0.0
    %104 = vmatpush.msra.mxu0 0.0
    %105 = vmatpush.msra.mxu0 0.0
    %106 = vmatpush.msra.mxu0 0.0
    %107 = vmatpush.msra.mxu0 0.0
    %108 = vmatpush.msra.mxu0 0.0
    %109 = vmatpush.msra.mxu0 0.0
    %110 = vmatpush.msra.mxu0 0.0
    %111 = vmatpush.msra.mxu0 0.0
    %112 = vmatpush.msra.mxu0 0.0
    %113 = vmatpush.msra.mxu0 0.0
    %114 = vmatpush.msra.mxu0 %v26
    %115 = vmatpush.msra.mxu0 %v25
    %116 = vmatpush.msra.mxu0 %v24
    %117 = vmatpush.msra.mxu0 %v23
    %118 = vmatmul.f32.gmra.mxu0 %v97
    %v119 = vpop.f32.mrf.mxu0
    %v120 = vadd.f32 %v94, %v119
    %121 = vmatmul.f32.gmra.mxu0 %v100
    %v122 = vpop.f32.mrf.mxu0
    %v123 = vadd.f32 %v95, %v122
    %124 = vdwg.mxu0
    %vm125 = vcmask 523264
    %126 = vst.msk [vmem:[#allocation2] sm:$0xff] %vm125, %v120
    %127 = vst.msk [vmem:[#allocation2 + $0x8] sm:$0xff] %vm125, %v123
    // Predicated region
    $region22: #{_lambda_.31} parent=1 // pred_check
      _
    $region23: #{_lambda_.31} parent=1 // pred_check_branch
      %129 = sbr.rel (0) target = $region25
    $region24: #{_lambda_.31} parent=1 // pred_region
      %131 = vsyncadd [#allocation3], 0
      %s132 = sshll.u32 [#allocation2], 4
      %s133 = int_to_ptr.vmem [resolvable:$true] %s132
      %s134 = sshll.u32 %s5, 4
      %s135 = int_to_ptr.hbm [resolvable:$true] %s134
      %140 = dma.vmem_to_hbm [thread:$0]  %s133, 256, %s135, [#allocation3], 128, 128, 8
    $region25: #{_lambda_.31} parent=1 // pred_fallthru
      _
    // Predicated region
    $region26: #{_lambda_.31} parent=1 // pred_check
      _
    $region27: #{_lambda_.31} parent=1 // pred_check_branch
      %142 = sbr.rel (0) target = $region29
    $region28: #{_lambda_.31} parent=1 // pred_region
      %144 = dma.done [#allocation3], 256
    $region29: #{_lambda_.31} parent=1 // pred_fallthru
      _
    %145 = vsyncpa [#allocation3], 1

</llo_original>
